<compile_context>
chip_gen: v7x
topology: tpu7x:2x2x1
jax: 0.10.0
libtpu: 0.0.40
codegen_flags: <defaults>
</compile_context>

<pallas_src>
import functools
import math

import numpy as np
import jax
import jax.numpy as jnp
from jax import lax
from jax.experimental import pallas as pl
from jax.experimental.pallas import tpu as pltpu

COSINE_EPS = 1e-6
OUT_LANES = 128          # lane 0 = weighted total, lanes 1..num_losses = individual losses
DEFAULT_TILE_ROWS = 128  # sublane rows per grid step (W lanes wide each)


def _fused_loss_kernel(w_ref, comp_ref, pred_ref, ref_ref, out_ref,
                       err_acc, atom_acc, phat_acc, rhat_acc, *,
                       dims, eps, main_loss, n_atoms, rows, tile_rows, width):
    """Fused multi-objective loss over lane-interleaved atom tiles.

    w_ref    : (num_losses,) f32 SMEM — softmax-normalized weights.
    comp_ref : (1, W) int32 VMEM      — lane -> component id (c % total_dim), constant.
    pred_ref : (tile_rows, W) VMEM    — predictions, interleaved-lane layout.
    ref_ref  : (tile_rows, W) VMEM    — reference, interleaved-lane layout.
    out_ref  : (1, OUT_LANES) f32 VMEM — written only on the last tile.
    *_acc    : (tile_rows, W) f32 VMEM scratch — lane-wise partial sums across tiles.
    """
    n_groups = len(dims)
    pid = pl.program_id(0)
    last = pl.num_programs(0) - 1

    @pl.when(pid == 0)
    def _init():
        err_acc[...] = jnp.zeros_like(err_acc)
        atom_acc[...] = jnp.zeros_like(atom_acc)
        phat_acc[...] = jnp.zeros_like(phat_acc)
        rhat_acc[...] = jnp.zeros_like(rhat_acc)

    comp = comp_ref[...]                      # (1, W) int32
    p = pred_ref[...]
    r = ref_ref[...]
    if p.dtype != jnp.float32:
        p = p.astype(jnp.float32)
    if r.dtype != jnp.float32:
        r = r.astype(jnp.float32)

    # Zero rows past the end of the array on the final partial tile (padded atoms then
    # contribute exactly zero to every accumulator).
    if rows % tile_rows != 0:
        row_idx = pid * tile_rows + lax.broadcasted_iota(jnp.int32, (tile_rows, 1), 0)
        row_ok = row_idx < rows
        p = jnp.where(row_ok, p, 0.0)
        r = jnp.where(row_ok, r, 0.0)

    def nbr3(x):
        # x[c-1] + x[c] + x[c+1]: symmetric rolls, so at each group's MIDDLE lane
        # (comp % 3 == 1) this is the 3-component group sum regardless of roll direction.
        return x + pltpu.roll(x, 1, 1) + pltpu.roll(x, width - 1, 1)

    rowdot = nbr3(p * r)          # valid at middle lanes
    sq_p = nbr3(p * p)
    sq_r = nbr3(r * r)
    norm_p = jnp.sqrt(sq_p)
    norm_r = jnp.sqrt(sq_r)

    # ---- main loss (mse / mae), accumulated lane-wise ----
    diff = p - r
    err_acc[...] += (diff * diff) if main_loss == "mse" else jnp.abs(diff)

    # ---- atom_vector_cosine_similarity (exact eps placement) ----
    atom_acc[...] += rowdot * pl.reciprocal(norm_r * norm_p + eps, approx=True)

    # ---- unit vectors for the O(N) cross_vector_cosine_similarity ----
    mid = comp == 1
    for g in range(1, n_groups):
        mid = jnp.logical_or(mid, comp == (3 * g + 1))
    inv_p = pl.reciprocal(norm_p + eps, approx=True)
    inv_r = pl.reciprocal(norm_r + eps, approx=True)
    b_p = nbr3(jnp.where(mid, inv_p, 0.0))   # per-atom 1/(|p|+eps) broadcast to its 3 lanes
    b_r = nbr3(jnp.where(mid, inv_r, 0.0))
    phat_acc[...] += p * b_p
    rhat_acc[...] += r * b_r

    # ---- finalize: all cross-lane reductions + weighting, last tile only ----
    @pl.when(pid == last)
    def _finalize():
        inv_n = 1.0 / float(n_atoms)
        err_col = jnp.sum(err_acc[...], axis=0, keepdims=True)
        atom_col = jnp.sum(atom_acc[...], axis=0, keepdims=True)
        p_col = jnp.sum(phat_acc[...], axis=0, keepdims=True)
        r_col = jnp.sum(rhat_acc[...], axis=0, keepdims=True)

        mains, crosses, atoms_ = [], [], []
        for g in range(n_groups):
            grp = jnp.logical_and(comp >= 3 * g, comp < 3 * g + 3)
            err_sum = jnp.sum(jnp.where(grp, err_col, 0.0))
            mains.append(err_sum * (inv_n / float(dims[g])))

            atom_sum = jnp.sum(jnp.where(comp == 3 * g + 1, atom_col, 0.0))
            atoms_.append(1.0 - atom_sum * inv_n)

            cross_dot = 0.0
            for k in range(3):
                d = 3 * g + k
                hp = jnp.sum(jnp.where(comp == d, p_col, 0.0))
                hr = jnp.sum(jnp.where(comp == d, r_col, 0.0))
                cross_dot = cross_dot + hp * hr
            crosses.append(1.0 - cross_dot * (inv_n * inv_n))

        # Order matches torch.concat([main_loss, cross_angle_loss, atom_vector_cos_similarity]).
        losses = mains + crosses + atoms_

        total = losses[0] * w_ref[0]
        for i in range(1, len(losses)):
            total = total + losses[i] * w_ref[i]

        lane = lax.broadcasted_iota(jnp.int32, (1, OUT_LANES), 1)
        slab = jnp.where(lane == 0, total, 0.0)
        for i, v in enumerate(losses):
            slab = slab + jnp.where(lane == i + 1, v, 0.0)
        out_ref[...] = slab.astype(out_ref.dtype)


def multiobjective_loss(predictions, reference, *, dimensions, raw_weights,
                        main_loss="mse", cosine_eps=COSINE_EPS,
                        return_individual_losses=False,
                        tile_rows=DEFAULT_TILE_ROWS):
    """JAX/Pallas equivalent of MultiobjectiveLoss.forward with
    cross_angle_loss_type='cross_vector_cosine_similarity' and
    atom_vector_cosine_similarity_loss enabled."""
    n_atoms, total_dim = predictions.shape
    assert total_dim == sum(dimensions)
    assert all(d == 3 for d in dimensions), "kernel is specialised to 3-D vector properties"
    assert reference.shape == predictions.shape
    num_losses = 3 * len(dimensions)
    assert num_losses <= OUT_LANES - 1

    # softmax of the raw weights (tiny glue), consumed as scalars from SMEM in-kernel.
    real_weights = jax.nn.softmax(raw_weights.astype(jnp.float32))

    # Interleaved-lane view: (N, D) row-major -> (rows, W) with W = lcm(D, 128).
    # This reshape is a free bitcast when N is a multiple of (W // D) atoms.
    width = total_dim * 128 // math.gcd(total_dim, 128)
    atoms_per_row = width // total_dim
    n_pad = (-n_atoms) % atoms_per_row
    if n_pad:
        # TODO(synk): have the producer emit row-padded activations; this pad is a real copy.
        predictions = jnp.pad(predictions, ((0, n_pad), (0, 0)))
        reference = jnp.pad(reference, ((0, n_pad), (0, 0)))
    rows = (n_atoms + n_pad) // atoms_per_row

    pred2d = predictions.reshape(rows, width)
    ref2d = reference.reshape(rows, width)

    # lane -> component id (tiny constant, one VMEM row).
    comp_ids = jnp.asarray(
        np.tile(np.arange(total_dim, dtype=np.int32), atoms_per_row).reshape(1, width))

    tr = min(tile_rows, rows)
    if tr != rows:
        tr = max(8, (tr // 8) * 8)          # (8,128) rule: multiple of 8 unless full extent
    n_tiles = pl.cdiv(rows, tr)

    kernel = functools.partial(
        _fused_loss_kernel,
        dims=tuple(dimensions), eps=float(cosine_eps), main_loss=main_loss,
        n_atoms=n_atoms, rows=rows, tile_rows=tr, width=width)

    out = pl.pallas_call(
        kernel,
        out_shape=jax.ShapeDtypeStruct((1, OUT_LANES), jnp.float32),
        grid=(n_tiles,),
        in_specs=[
            pl.BlockSpec(memory_space=pltpu.MemorySpace.SMEM),   # softmax weights (6,)
            pl.BlockSpec((1, width), lambda i: (0, 0)),          # lane -> component id
            pl.BlockSpec((tr, width), lambda i: (i, 0)),         # predictions (interleaved)
            pl.BlockSpec((tr, width), lambda i: (i, 0)),         # reference  (interleaved)
        ],
        out_specs=pl.BlockSpec((1, OUT_LANES), lambda i: (0, 0)),
        scratch_shapes=[pltpu.VMEM((tr, width), jnp.float32)] * 4,
        compiler_params=pltpu.CompilerParams(
            dimension_semantics=("arbitrary",),
            vmem_limit_bytes=32 * 1024 * 1024),
    )(real_weights, comp_ids, pred2d, ref2d)

    if return_individual_losses:
        return out[0, 1:1 + num_losses]
    return out[0, 0]


# ---------------- pure-JAX reference (exact torch parity, for validation) ----------------
def _reference_loss(predictions, reference, dimensions, raw_weights, eps, main_loss):
    offs = np.cumsum([0] + list(dimensions))
    ps = [predictions[:, offs[i]:offs[i + 1]] for i in range(len(dimensions))]
    rs = [reference[:, offs[i]:offs[i + 1]] for i in range(len(dimensions))]
    f = (lambda x: x * x) if main_loss == "mse" else jnp.abs
    main = [jnp.mean(f(p - r)) for p, r in zip(ps, rs)]
    cross, atom = [], []
    for p, r in zip(ps, rs):
        dot = r @ p.T
        nr = jnp.linalg.norm(r, axis=1)
        np_ = jnp.linalg.norm(p, axis=1)
        cross.append(jnp.mean(1.0 - dot / (nr[:, None] * np_[None, :] + eps)))
        atom.append(jnp.mean(1.0 - jnp.diag(dot) / (nr * np_ + eps)))
    losses = jnp.stack(main + cross + atom)
    w = jnp.exp(raw_weights)
    w = w / jnp.sum(w)
    return jnp.sum(losses * w)


if __name__ == "__main__":
    dimensions = [3, 3]          # two 3-D vector properties per atom
    n_atoms = 512
    total_dim = sum(dimensions)

    key = jax.random.PRNGKey(0)
    kp, kr = jax.random.split(key)
    predictions = jax.random.normal(kp, (n_atoms, total_dim), dtype=jnp.float32)
    reference = jax.random.normal(kr, (n_atoms, total_dim), dtype=jnp.float32)

    # non-learnable weights path: weights default to ones(len(dimensions) * num_weights)
    num_weights = 3  # main + cross_angle + atom_vector
    raw_weights = jnp.ones((len(dimensions) * num_weights,), dtype=jnp.float32)

    out = multiobjective_loss(
        predictions, reference,
        dimensions=dimensions,
        raw_weights=raw_weights,
        main_loss="mse",
        cosine_eps=COSINE_EPS,
    )
    out = jax.block_until_ready(out)

    ref_out = jax.block_until_ready(
        _reference_loss(predictions, reference, dimensions, raw_weights,
                        COSINE_EPS, "mse"))

    # Tolerance accounts for the approximate EUP reciprocals (pl.reciprocal(approx=True)) and
    # the per-norm-eps O(N) reformulation of the cross-cosine loss; structural/mask/roll errors
    # would show up as O(0.1-1) deviations and still be caught.
    if not np.allclose(np.asarray(out), np.asarray(ref_out), rtol=1e-2, atol=1e-3):
        raise AssertionError(f"mismatch: pallas={float(out)} ref={float(ref_out)}")

    print("KERNEL_OK")
</pallas_src>

<mosaic_0001>
module attributes {stable_mosaic.version = 11 : i64} {
  func.func @_fused_loss_kernel(%arg0: i32, %arg1: memref<6xf32, #tpu.memory_space<smem>>, %arg2: memref<1x384xi32, #tpu.memory_space<vmem>>, %arg3: memref<8x384xf32, #tpu.memory_space<vmem>>, %arg4: memref<8x384xf32, #tpu.memory_space<vmem>>, %arg5: memref<1x128xf32, #tpu.memory_space<vmem>>, %arg6: memref<8x384xf32, #tpu.memory_space<vmem>>, %arg7: memref<8x384xf32, #tpu.memory_space<vmem>>, %arg8: memref<8x384xf32, #tpu.memory_space<vmem>>, %arg9: memref<8x384xf32, #tpu.memory_space<vmem>>) attributes {dimension_semantics = [#tpu.dimension_semantics<arbitrary>], iteration_bounds = array<i64: 1>, scalar_prefetch = 0 : i64, scratch_operands = 4 : i64, tpu.core_type = #tpu.core_type<tc>, window_params = [{transform_indices = @transform_0, window_bounds = array<i64: 6>}, {pipeline_mode = #tpu.pipeline_mode<synchronous>, transform_indices = @transform_1, window_bounds = array<i64: 1, 384>}, {transform_indices = @transform_2, window_bounds = array<i64: 8, 384>}, {transform_indices = @transform_3, window_bounds = array<i64: 8, 384>}, {pipeline_mode = #tpu.pipeline_mode<synchronous>, transform_indices = @transform_4, window_bounds = array<i64: 1, 128>}]} {
    %c0_i32 = arith.constant 0 : i32
    %0 = arith.cmpi eq, %arg0, %c0_i32 : i32
    %1 = arith.extui %0 : i1 to i32
    %c0_i32_0 = arith.constant 0 : i32
    %2 = arith.cmpi ne, %1, %c0_i32_0 : i32
    scf.if %2 {
      %cst_37 = arith.constant 0.000000e+00 : f32
      %74 = vector.broadcast %cst_37 : f32 to vector<8x384xf32>
      %c0_38 = arith.constant 0 : index
      %c0_39 = arith.constant 0 : index
      %75 = vector.load %arg6[%c0_38, %c0_39] : memref<8x384xf32, #tpu.memory_space<vmem>>, vector<8x384xf32>
      tpu.vector_store %arg6[%c0_38, %c0_39], %74 {strides = array<i32>} : memref<8x384xf32, #tpu.memory_space<vmem>>, vector<8x384xf32>,
      %cst_40 = arith.constant 0.000000e+00 : f32
      %76 = vector.broadcast %cst_40 : f32 to vector<8x384xf32>
      %c0_41 = arith.constant 0 : index
      %c0_42 = arith.constant 0 : index
      %77 = vector.load %arg7[%c0_41, %c0_42] : memref<8x384xf32, #tpu.memory_space<vmem>>, vector<8x384xf32>
      tpu.vector_store %arg7[%c0_41, %c0_42], %76 {strides = array<i32>} : memref<8x384xf32, #tpu.memory_space<vmem>>, vector<8x384xf32>,
      %cst_43 = arith.constant 0.000000e+00 : f32
      %78 = vector.broadcast %cst_43 : f32 to vector<8x384xf32>
      %c0_44 = arith.constant 0 : index
      %c0_45 = arith.constant 0 : index
      %79 = vector.load %arg8[%c0_44, %c0_45] : memref<8x384xf32, #tpu.memory_space<vmem>>, vector<8x384xf32>
      tpu.vector_store %arg8[%c0_44, %c0_45], %78 {strides = array<i32>} : memref<8x384xf32, #tpu.memory_space<vmem>>, vector<8x384xf32>,
      %cst_46 = arith.constant 0.000000e+00 : f32
      %80 = vector.broadcast %cst_46 : f32 to vector<8x384xf32>
      %c0_47 = arith.constant 0 : index
      %c0_48 = arith.constant 0 : index
      %81 = vector.load %arg9[%c0_47, %c0_48] : memref<8x384xf32, #tpu.memory_space<vmem>>, vector<8x384xf32>
      tpu.vector_store %arg9[%c0_47, %c0_48], %80 {strides = array<i32>} : memref<8x384xf32, #tpu.memory_space<vmem>>, vector<8x384xf32>,
    } else {
    }
    %c0 = arith.constant 0 : index
    %c0_1 = arith.constant 0 : index
    %3 = vector.load %arg2[%c0, %c0_1] : memref<1x384xi32, #tpu.memory_space<vmem>>, vector<1x384xi32>
    %c0_2 = arith.constant 0 : index
    %c0_3 = arith.constant 0 : index
    %4 = vector.load %arg3[%c0_2, %c0_3] : memref<8x384xf32, #tpu.memory_space<vmem>>, vector<8x384xf32>
    %c0_4 = arith.constant 0 : index
    %c0_5 = arith.constant 0 : index
    %5 = vector.load %arg4[%c0_4, %c0_5] : memref<8x384xf32, #tpu.memory_space<vmem>>, vector<8x384xf32>
    %6 = arith.mulf %4, %5 : vector<8x384xf32>
    %c1_i32 = arith.constant 1 : i32
    %7 = tpu.dynamic_rotate %6 by %c1_i32 dim 1 : vector<8x384xf32>, i32 -> vector<8x384xf32>
    %8 = arith.addf %6, %7 : vector<8x384xf32>
    %c383_i32 = arith.constant 383 : i32
    %9 = tpu.dynamic_rotate %6 by %c383_i32 dim 1 : vector<8x384xf32>, i32 -> vector<8x384xf32>
    %10 = arith.addf %8, %9 : vector<8x384xf32>
    %11 = arith.mulf %4, %4 : vector<8x384xf32>
    %c1_i32_6 = arith.constant 1 : i32
    %12 = tpu.dynamic_rotate %11 by %c1_i32_6 dim 1 : vector<8x384xf32>, i32 -> vector<8x384xf32>
    %13 = arith.addf %11, %12 : vector<8x384xf32>
    %c383_i32_7 = arith.constant 383 : i32
    %14 = tpu.dynamic_rotate %11 by %c383_i32_7 dim 1 : vector<8x384xf32>, i32 -> vector<8x384xf32>
    %15 = arith.addf %13, %14 : vector<8x384xf32>
    %16 = arith.mulf %5, %5 : vector<8x384xf32>
    %c1_i32_8 = arith.constant 1 : i32
    %17 = tpu.dynamic_rotate %16 by %c1_i32_8 dim 1 : vector<8x384xf32>, i32 -> vector<8x384xf32>
    %18 = arith.addf %16, %17 : vector<8x384xf32>
    %c383_i32_9 = arith.constant 383 : i32
    %19 = tpu.dynamic_rotate %16 by %c383_i32_9 dim 1 : vector<8x384xf32>, i32 -> vector<8x384xf32>
    %20 = arith.addf %18, %19 : vector<8x384xf32>
    %21 = math.sqrt %15 : vector<8x384xf32>
    %22 = math.sqrt %20 : vector<8x384xf32>
    %23 = arith.subf %4, %5 : vector<8x384xf32>
    %c0_10 = arith.constant 0 : index
    %c0_11 = arith.constant 0 : index
    %24 = vector.load %arg6[%c0_10, %c0_11] : memref<8x384xf32, #tpu.memory_space<vmem>>, vector<8x384xf32>
    %25 = arith.mulf %23, %23 : vector<8x384xf32>
    %26 = arith.addf %24, %25 : vector<8x384xf32>
    %c0_12 = arith.constant 0 : index
    %c0_13 = arith.constant 0 : index
    %27 = vector.load %arg6[%c0_12, %c0_13] : memref<8x384xf32, #tpu.memory_space<vmem>>, vector<8x384xf32>
    tpu.vector_store %arg6[%c0_12, %c0_13], %26 {strides = array<i32>} : memref<8x384xf32, #tpu.memory_space<vmem>>, vector<8x384xf32>,
    %c0_14 = arith.constant 0 : index
    %c0_15 = arith.constant 0 : index
    %28 = vector.load %arg7[%c0_14, %c0_15] : memref<8x384xf32, #tpu.memory_space<vmem>>, vector<8x384xf32>
    %29 = arith.mulf %22, %21 : vector<8x384xf32>
    %cst = arith.constant 9.99999997E-7 : f32
    %30 = vector.broadcast %cst : f32 to vector<8x384xf32>
    %31 = arith.addf %29, %30 : vector<8x384xf32>
    %32 = tpu.reciprocal %31 {approx = true} : vector<8x384xf32> -> vector<8x384xf32>
    %33 = arith.mulf %10, %32 : vector<8x384xf32>
    %34 = arith.addf %28, %33 : vector<8x384xf32>
    %c0_16 = arith.constant 0 : index
    %c0_17 = arith.constant 0 : index
    %35 = vector.load %arg7[%c0_16, %c0_17] : memref<8x384xf32, #tpu.memory_space<vmem>>, vector<8x384xf32>
    tpu.vector_store %arg7[%c0_16, %c0_17], %34 {strides = array<i32>} : memref<8x384xf32, #tpu.memory_space<vmem>>, vector<8x384xf32>,
    %c1_i32_18 = arith.constant 1 : i32
    %36 = vector.broadcast %c1_i32_18 : i32 to vector<1x384xi32>
    %37 = arith.cmpi eq, %3, %36 : vector<1x384xi32>
    %c4_i32 = arith.constant 4 : i32
    %38 = vector.broadcast %c4_i32 : i32 to vector<1x384xi32>
    %39 = arith.cmpi eq, %3, %38 : vector<1x384xi32>
    %40 = arith.ori %37, %39 : vector<1x384xi1>
    %cst_19 = arith.constant 9.99999997E-7 : f32
    %41 = vector.broadcast %cst_19 : f32 to vector<8x384xf32>
    %42 = arith.addf %21, %41 : vector<8x384xf32>
    %43 = tpu.reciprocal %42 {approx = true} : vector<8x384xf32> -> vector<8x384xf32>
    %cst_20 = arith.constant 9.99999997E-7 : f32
    %44 = vector.broadcast %cst_20 : f32 to vector<8x384xf32>
    %45 = arith.addf %22, %44 : vector<8x384xf32>
    %46 = tpu.reciprocal %45 {approx = true} : vector<8x384xf32> -> vector<8x384xf32>
    %cst_21 = arith.constant 0.000000e+00 : f32
    %47 = vector.shape_cast %40 : vector<1x384xi1> to vector<1x384xi1>
    %48 = vector.broadcast %47 : vector<1x384xi1> to vector<8x384xi1>
    %49 = vector.broadcast %cst_21 : f32 to vector<8x384xf32>
    %50 = arith.select %48, %43, %49 : vector<8x384xi1>, vector<8x384xf32>
    %c1_i32_22 = arith.constant 1 : i32
    %51 = tpu.dynamic_rotate %50 by %c1_i32_22 dim 1 : vector<8x384xf32>, i32 -> vector<8x384xf32>
    %52 = arith.addf %50, %51 : vector<8x384xf32>
    %c383_i32_23 = arith.constant 383 : i32
    %53 = tpu.dynamic_rotate %50 by %c383_i32_23 dim 1 : vector<8x384xf32>, i32 -> vector<8x384xf32>
    %54 = arith.addf %52, %53 : vector<8x384xf32>
    %cst_24 = arith.constant 0.000000e+00 : f32
    %55 = vector.shape_cast %40 : vector<1x384xi1> to vector<1x384xi1>
    %56 = vector.broadcast %55 : vector<1x384xi1> to vector<8x384xi1>
    %57 = vector.broadcast %cst_24 : f32 to vector<8x384xf32>
    %58 = arith.select %56, %46, %57 : vector<8x384xi1>, vector<8x384xf32>
    %c1_i32_25 = arith.constant 1 : i32
    %59 = tpu.dynamic_rotate %58 by %c1_i32_25 dim 1 : vector<8x384xf32>, i32 -> vector<8x384xf32>
    %60 = arith.addf %58, %59 : vector<8x384xf32>
    %c383_i32_26 = arith.constant 383 : i32
    %61 = tpu.dynamic_rotate %58 by %c383_i32_26 dim 1 : vector<8x384xf32>, i32 -> vector<8x384xf32>
    %62 = arith.addf %60, %61 : vector<8x384xf32>
    %c0_27 = arith.constant 0 : index
    %c0_28 = arith.constant 0 : index
    %63 = vector.load %arg8[%c0_27, %c0_28] : memref<8x384xf32, #tpu.memory_space<vmem>>, vector<8x384xf32>
    %64 = arith.mulf %4, %54 : vector<8x384xf32>
    %65 = arith.addf %63, %64 : vector<8x384xf32>
    %c0_29 = arith.constant 0 : index
    %c0_30 = arith.constant 0 : index
    %66 = vector.load %arg8[%c0_29, %c0_30] : memref<8x384xf32, #tpu.memory_space<vmem>>, vector<8x384xf32>
    tpu.vector_store %arg8[%c0_29, %c0_30], %65 {strides = array<i32>} : memref<8x384xf32, #tpu.memory_space<vmem>>, vector<8x384xf32>,
    %c0_31 = arith.constant 0 : index
    %c0_32 = arith.constant 0 : index
    %67 = vector.load %arg9[%c0_31, %c0_32] : memref<8x384xf32, #tpu.memory_space<vmem>>, vector<8x384xf32>
    %68 = arith.mulf %5, %62 : vector<8x384xf32>
    %69 = arith.addf %67, %68 : vector<8x384xf32>
    %c0_33 = arith.constant 0 : index
    %c0_34 = arith.constant 0 : index
    %70 = vector.load %arg9[%c0_33, %c0_34] : memref<8x384xf32, #tpu.memory_space<vmem>>, vector<8x384xf32>
    tpu.vector_store %arg9[%c0_33, %c0_34], %69 {strides = array<i32>} : memref<8x384xf32, #tpu.memory_space<vmem>>, vector<8x384xf32>,
    %c0_i32_35 = arith.constant 0 : i32
    %71 = arith.cmpi eq, %arg0, %c0_i32_35 : i32
    %72 = arith.extui %71 : i1 to i32
    %c0_i32_36 = arith.constant 0 : i32
    %73 = arith.cmpi ne, %72, %c0_i32_36 : i32
    scf.if %73 {
      %c0_37 = arith.constant 0 : index
      %c0_38 = arith.constant 0 : index
      %74 = vector.load %arg6[%c0_37, %c0_38] : memref<8x384xf32, #tpu.memory_space<vmem>>, vector<8x384xf32>
      %cst_39 = arith.constant dense<0.000000e+00> : vector<384xf32>
      %75 = vector.multi_reduction <add>, %74, %cst_39 [0] : vector<8x384xf32> to vector<384xf32>
      %76 = vector.shape_cast %75 : vector<384xf32> to vector<1x384xf32>
      %c0_40 = arith.constant 0 : index
      %c0_41 = arith.constant 0 : index
      %77 = vector.load %arg7[%c0_40, %c0_41] : memref<8x384xf32, #tpu.memory_space<vmem>>, vector<8x384xf32>
      %cst_42 = arith.constant dense<0.000000e+00> : vector<384xf32>
      %78 = vector.multi_reduction <add>, %77, %cst_42 [0] : vector<8x384xf32> to vector<384xf32>
      %79 = vector.shape_cast %78 : vector<384xf32> to vector<1x384xf32>
      %c0_43 = arith.constant 0 : index
      %c0_44 = arith.constant 0 : index
      %80 = vector.load %arg8[%c0_43, %c0_44] : memref<8x384xf32, #tpu.memory_space<vmem>>, vector<8x384xf32>
      %cst_45 = arith.constant dense<0.000000e+00> : vector<384xf32>
      %81 = vector.multi_reduction <add>, %80, %cst_45 [0] : vector<8x384xf32> to vector<384xf32>
      %82 = vector.shape_cast %81 : vector<384xf32> to vector<1x384xf32>
      %c0_46 = arith.constant 0 : index
      %c0_47 = arith.constant 0 : index
      %83 = vector.load %arg9[%c0_46, %c0_47] : memref<8x384xf32, #tpu.memory_space<vmem>>, vector<8x384xf32>
      %cst_48 = arith.constant dense<0.000000e+00> : vector<384xf32>
      %84 = vector.multi_reduction <add>, %83, %cst_48 [0] : vector<8x384xf32> to vector<384xf32>
      %85 = vector.shape_cast %84 : vector<384xf32> to vector<1x384xf32>
      %c0_i32_49 = arith.constant 0 : i32
      %86 = vector.broadcast %c0_i32_49 : i32 to vector<1x384xi32>
      %87 = arith.cmpi sge, %3, %86 : vector<1x384xi32>
      %c3_i32 = arith.constant 3 : i32
      %88 = vector.broadcast %c3_i32 : i32 to vector<1x384xi32>
      %89 = arith.cmpi slt, %3, %88 : vector<1x384xi32>
      %90 = arith.andi %87, %89 : vector<1x384xi1>
      %cst_50 = arith.constant 0.000000e+00 : f32
      %91 = vector.broadcast %cst_50 : f32 to vector<1x384xf32>
      %92 = arith.select %90, %76, %91 : vector<1x384xi1>, vector<1x384xf32>
      %93 = vector.shape_cast %92 : vector<1x384xf32> to vector<1x1x384xf32>
      %cst_51 = arith.constant dense<0.000000e+00> : vector<1xf32>
      %94 = vector.multi_reduction <add>, %93, %cst_51 [1, 2] : vector<1x1x384xf32> to vector<1xf32>
      %95 = vector.shape_cast %94 : vector<1xf32> to vector<1x1x1xf32>
      %96 = vector.extract %95[0, 0, 0] : f32 from vector<1x1x1xf32>
      %cst_52 = arith.constant 6.51041686E-4 : f32
      %97 = arith.mulf %96, %cst_52 : f32
      %c1_i32_53 = arith.constant 1 : i32
      %98 = vector.broadcast %c1_i32_53 : i32 to vector<1x384xi32>
      %99 = arith.cmpi eq, %3, %98 : vector<1x384xi32>
      %cst_54 = arith.constant 0.000000e+00 : f32
      %100 = vector.broadcast %cst_54 : f32 to vector<1x384xf32>
      %101 = arith.select %99, %79, %100 : vector<1x384xi1>, vector<1x384xf32>
      %102 = vector.shape_cast %101 : vector<1x384xf32> to vector<1x1x384xf32>
      %cst_55 = arith.constant dense<0.000000e+00> : vector<1xf32>
      %103 = vector.multi_reduction <add>, %102, %cst_55 [1, 2] : vector<1x1x384xf32> to vector<1xf32>
      %104 = vector.shape_cast %103 : vector<1xf32> to vector<1x1x1xf32>
      %105 = vector.extract %104[0, 0, 0] : f32 from vector<1x1x1xf32>
      %cst_56 = arith.constant 0.001953125 : f32
      %106 = arith.mulf %105, %cst_56 : f32
      %cst_57 = arith.constant 1.000000e+00 : f32
      %107 = arith.subf %cst_57, %106 : f32
      %c0_i32_58 = arith.constant 0 : i32
      %108 = vector.broadcast %c0_i32_58 : i32 to vector<1x384xi32>
      %109 = arith.cmpi eq, %3, %108 : vector<1x384xi32>
      %cst_59 = arith.constant 0.000000e+00 : f32
      %110 = vector.broadcast %cst_59 : f32 to vector<1x384xf32>
      %111 = arith.select %109, %82, %110 : vector<1x384xi1>, vector<1x384xf32>
      %112 = vector.shape_cast %111 : vector<1x384xf32> to vector<1x1x384xf32>
      %cst_60 = arith.constant dense<0.000000e+00> : vector<1xf32>
      %113 = vector.multi_reduction <add>, %112, %cst_60 [1, 2] : vector<1x1x384xf32> to vector<1xf32>
      %114 = vector.shape_cast %113 : vector<1xf32> to vector<1x1x1xf32>
      %115 = vector.extract %114[0, 0, 0] : f32 from vector<1x1x1xf32>
      %c0_i32_61 = arith.constant 0 : i32
      %116 = vector.broadcast %c0_i32_61 : i32 to vector<1x384xi32>
      %117 = arith.cmpi eq, %3, %116 : vector<1x384xi32>
      %cst_62 = arith.constant 0.000000e+00 : f32
      %118 = vector.broadcast %cst_62 : f32 to vector<1x384xf32>
      %119 = arith.select %117, %85, %118 : vector<1x384xi1>, vector<1x384xf32>
      %120 = vector.shape_cast %119 : vector<1x384xf32> to vector<1x1x384xf32>
      %cst_63 = arith.constant dense<0.000000e+00> : vector<1xf32>
      %121 = vector.multi_reduction <add>, %120, %cst_63 [1, 2] : vector<1x1x384xf32> to vector<1xf32>
      %122 = vector.shape_cast %121 : vector<1xf32> to vector<1x1x1xf32>
      %123 = vector.extract %122[0, 0, 0] : f32 from vector<1x1x1xf32>
      %124 = arith.mulf %115, %123 : f32
      %cst_64 = arith.constant 0.000000e+00 : f32
      %125 = arith.addf %cst_64, %124 : f32
      %c1_i32_65 = arith.constant 1 : i32
      %126 = vector.broadcast %c1_i32_65 : i32 to vector<1x384xi32>
      %127 = arith.cmpi eq, %3, %126 : vector<1x384xi32>
      %cst_66 = arith.constant 0.000000e+00 : f32
      %128 = vector.broadcast %cst_66 : f32 to vector<1x384xf32>
      %129 = arith.select %127, %82, %128 : vector<1x384xi1>, vector<1x384xf32>
      %130 = vector.shape_cast %129 : vector<1x384xf32> to vector<1x1x384xf32>
      %cst_67 = arith.constant dense<0.000000e+00> : vector<1xf32>
      %131 = vector.multi_reduction <add>, %130, %cst_67 [1, 2] : vector<1x1x384xf32> to vector<1xf32>
      %132 = vector.shape_cast %131 : vector<1xf32> to vector<1x1x1xf32>
      %133 = vector.extract %132[0, 0, 0] : f32 from vector<1x1x1xf32>
      %c1_i32_68 = arith.constant 1 : i32
      %134 = vector.broadcast %c1_i32_68 : i32 to vector<1x384xi32>
      %135 = arith.cmpi eq, %3, %134 : vector<1x384xi32>
      %cst_69 = arith.constant 0.000000e+00 : f32
      %136 = vector.broadcast %cst_69 : f32 to vector<1x384xf32>
      %137 = arith.select %135, %85, %136 : vector<1x384xi1>, vector<1x384xf32>
      %138 = vector.shape_cast %137 : vector<1x384xf32> to vector<1x1x384xf32>
      %cst_70 = arith.constant dense<0.000000e+00> : vector<1xf32>
      %139 = vector.multi_reduction <add>, %138, %cst_70 [1, 2] : vector<1x1x384xf32> to vector<1xf32>
      %140 = vector.shape_cast %139 : vector<1xf32> to vector<1x1x1xf32>
      %141 = vector.extract %140[0, 0, 0] : f32 from vector<1x1x1xf32>
      %142 = arith.mulf %133, %141 : f32
      %143 = arith.addf %125, %142 : f32
      %c2_i32 = arith.constant 2 : i32
      %144 = vector.broadcast %c2_i32 : i32 to vector<1x384xi32>
      %145 = arith.cmpi eq, %3, %144 : vector<1x384xi32>
      %cst_71 = arith.constant 0.000000e+00 : f32
      %146 = vector.broadcast %cst_71 : f32 to vector<1x384xf32>
      %147 = arith.select %145, %82, %146 : vector<1x384xi1>, vector<1x384xf32>
      %148 = vector.shape_cast %147 : vector<1x384xf32> to vector<1x1x384xf32>
      %cst_72 = arith.constant dense<0.000000e+00> : vector<1xf32>
      %149 = vector.multi_reduction <add>, %148, %cst_72 [1, 2] : vector<1x1x384xf32> to vector<1xf32>
      %150 = vector.shape_cast %149 : vector<1xf32> to vector<1x1x1xf32>
      %151 = vector.extract %150[0, 0, 0] : f32 from vector<1x1x1xf32>
      %c2_i32_73 = arith.constant 2 : i32
      %152 = vector.broadcast %c2_i32_73 : i32 to vector<1x384xi32>
      %153 = arith.cmpi eq, %3, %152 : vector<1x384xi32>
      %cst_74 = arith.constant 0.000000e+00 : f32
      %154 = vector.broadcast %cst_74 : f32 to vector<1x384xf32>
      %155 = arith.select %153, %85, %154 : vector<1x384xi1>, vector<1x384xf32>
      %156 = vector.shape_cast %155 : vector<1x384xf32> to vector<1x1x384xf32>
      %cst_75 = arith.constant dense<0.000000e+00> : vector<1xf32>
      %157 = vector.multi_reduction <add>, %156, %cst_75 [1, 2] : vector<1x1x384xf32> to vector<1xf32>
      %158 = vector.shape_cast %157 : vector<1xf32> to vector<1x1x1xf32>
      %159 = vector.extract %158[0, 0, 0] : f32 from vector<1x1x1xf32>
      %160 = arith.mulf %151, %159 : f32
      %161 = arith.addf %143, %160 : f32
      %cst_76 = arith.constant 3.81469727E-6 : f32
      %162 = arith.mulf %161, %cst_76 : f32
      %cst_77 = arith.constant 1.000000e+00 : f32
      %163 = arith.subf %cst_77, %162 : f32
      %c3_i32_78 = arith.constant 3 : i32
      %164 = vector.broadcast %c3_i32_78 : i32 to vector<1x384xi32>
      %165 = arith.cmpi sge, %3, %164 : vector<1x384xi32>
      %c6_i32 = arith.constant 6 : i32
      %166 = vector.broadcast %c6_i32 : i32 to vector<1x384xi32>
      %167 = arith.cmpi slt, %3, %166 : vector<1x384xi32>
      %168 = arith.andi %165, %167 : vector<1x384xi1>
      %cst_79 = arith.constant 0.000000e+00 : f32
      %169 = vector.broadcast %cst_79 : f32 to vector<1x384xf32>
      %170 = arith.select %168, %76, %169 : vector<1x384xi1>, vector<1x384xf32>
      %171 = vector.shape_cast %170 : vector<1x384xf32> to vector<1x1x384xf32>
      %cst_80 = arith.constant dense<0.000000e+00> : vector<1xf32>
      %172 = vector.multi_reduction <add>, %171, %cst_80 [1, 2] : vector<1x1x384xf32> to vector<1xf32>
      %173 = vector.shape_cast %172 : vector<1xf32> to vector<1x1x1xf32>
      %174 = vector.extract %173[0, 0, 0] : f32 from vector<1x1x1xf32>
      %cst_81 = arith.constant 6.51041686E-4 : f32
      %175 = arith.mulf %174, %cst_81 : f32
      %c4_i32_82 = arith.constant 4 : i32
      %176 = vector.broadcast %c4_i32_82 : i32 to vector<1x384xi32>
      %177 = arith.cmpi eq, %3, %176 : vector<1x384xi32>
      %cst_83 = arith.constant 0.000000e+00 : f32
      %178 = vector.broadcast %cst_83 : f32 to vector<1x384xf32>
      %179 = arith.select %177, %79, %178 : vector<1x384xi1>, vector<1x384xf32>
      %180 = vector.shape_cast %179 : vector<1x384xf32> to vector<1x1x384xf32>
      %cst_84 = arith.constant dense<0.000000e+00> : vector<1xf32>
      %181 = vector.multi_reduction <add>, %180, %cst_84 [1, 2] : vector<1x1x384xf32> to vector<1xf32>
      %182 = vector.shape_cast %181 : vector<1xf32> to vector<1x1x1xf32>
      %183 = vector.extract %182[0, 0, 0] : f32 from vector<1x1x1xf32>
      %cst_85 = arith.constant 0.001953125 : f32
      %184 = arith.mulf %183, %cst_85 : f32
      %cst_86 = arith.constant 1.000000e+00 : f32
      %185 = arith.subf %cst_86, %184 : f32
      %c3_i32_87 = arith.constant 3 : i32
      %186 = vector.broadcast %c3_i32_87 : i32 to vector<1x384xi32>
      %187 = arith.cmpi eq, %3, %186 : vector<1x384xi32>
      %cst_88 = arith.constant 0.000000e+00 : f32
      %188 = vector.broadcast %cst_88 : f32 to vector<1x384xf32>
      %189 = arith.select %187, %82, %188 : vector<1x384xi1>, vector<1x384xf32>
      %190 = vector.shape_cast %189 : vector<1x384xf32> to vector<1x1x384xf32>
      %cst_89 = arith.constant dense<0.000000e+00> : vector<1xf32>
      %191 = vector.multi_reduction <add>, %190, %cst_89 [1, 2] : vector<1x1x384xf32> to vector<1xf32>
      %192 = vector.shape_cast %191 : vector<1xf32> to vector<1x1x1xf32>
      %193 = vector.extract %192[0, 0, 0] : f32 from vector<1x1x1xf32>
      %c3_i32_90 = arith.constant 3 : i32
      %194 = vector.broadcast %c3_i32_90 : i32 to vector<1x384xi32>
      %195 = arith.cmpi eq, %3, %194 : vector<1x384xi32>
      %cst_91 = arith.constant 0.000000e+00 : f32
      %196 = vector.broadcast %cst_91 : f32 to vector<1x384xf32>
      %197 = arith.select %195, %85, %196 : vector<1x384xi1>, vector<1x384xf32>
      %198 = vector.shape_cast %197 : vector<1x384xf32> to vector<1x1x384xf32>
      %cst_92 = arith.constant dense<0.000000e+00> : vector<1xf32>
      %199 = vector.multi_reduction <add>, %198, %cst_92 [1, 2] : vector<1x1x384xf32> to vector<1xf32>
      %200 = vector.shape_cast %199 : vector<1xf32> to vector<1x1x1xf32>
      %201 = vector.extract %200[0, 0, 0] : f32 from vector<1x1x1xf32>
      %202 = arith.mulf %193, %201 : f32
      %cst_93 = arith.constant 0.000000e+00 : f32
      %203 = arith.addf %cst_93, %202 : f32
      %c4_i32_94 = arith.constant 4 : i32
      %204 = vector.broadcast %c4_i32_94 : i32 to vector<1x384xi32>
      %205 = arith.cmpi eq, %3, %204 : vector<1x384xi32>
      %cst_95 = arith.constant 0.000000e+00 : f32
      %206 = vector.broadcast %cst_95 : f32 to vector<1x384xf32>
      %207 = arith.select %205, %82, %206 : vector<1x384xi1>, vector<1x384xf32>
      %208 = vector.shape_cast %207 : vector<1x384xf32> to vector<1x1x384xf32>
      %cst_96 = arith.constant dense<0.000000e+00> : vector<1xf32>
      %209 = vector.multi_reduction <add>, %208, %cst_96 [1, 2] : vector<1x1x384xf32> to vector<1xf32>
      %210 = vector.shape_cast %209 : vector<1xf32> to vector<1x1x1xf32>
      %211 = vector.extract %210[0, 0, 0] : f32 from vector<1x1x1xf32>
      %c4_i32_97 = arith.constant 4 : i32
      %212 = vector.broadcast %c4_i32_97 : i32 to vector<1x384xi32>
      %213 = arith.cmpi eq, %3, %212 : vector<1x384xi32>
      %cst_98 = arith.constant 0.000000e+00 : f32
      %214 = vector.broadcast %cst_98 : f32 to vector<1x384xf32>
      %215 = arith.select %213, %85, %214 : vector<1x384xi1>, vector<1x384xf32>
      %216 = vector.shape_cast %215 : vector<1x384xf32> to vector<1x1x384xf32>
      %cst_99 = arith.constant dense<0.000000e+00> : vector<1xf32>
      %217 = vector.multi_reduction <add>, %216, %cst_99 [1, 2] : vector<1x1x384xf32> to vector<1xf32>
      %218 = vector.shape_cast %217 : vector<1xf32> to vector<1x1x1xf32>
      %219 = vector.extract %218[0, 0, 0] : f32 from vector<1x1x1xf32>
      %220 = arith.mulf %211, %219 : f32
      %221 = arith.addf %203, %220 : f32
      %c5_i32 = arith.constant 5 : i32
      %222 = vector.broadcast %c5_i32 : i32 to vector<1x384xi32>
      %223 = arith.cmpi eq, %3, %222 : vector<1x384xi32>
      %cst_100 = arith.constant 0.000000e+00 : f32
      %224 = vector.broadcast %cst_100 : f32 to vector<1x384xf32>
      %225 = arith.select %223, %82, %224 : vector<1x384xi1>, vector<1x384xf32>
      %226 = vector.shape_cast %225 : vector<1x384xf32> to vector<1x1x384xf32>
      %cst_101 = arith.constant dense<0.000000e+00> : vector<1xf32>
      %227 = vector.multi_reduction <add>, %226, %cst_101 [1, 2] : vector<1x1x384xf32> to vector<1xf32>
      %228 = vector.shape_cast %227 : vector<1xf32> to vector<1x1x1xf32>
      %229 = vector.extract %228[0, 0, 0] : f32 from vector<1x1x1xf32>
      %c5_i32_102 = arith.constant 5 : i32
      %230 = vector.broadcast %c5_i32_102 : i32 to vector<1x384xi32>
      %231 = arith.cmpi eq, %3, %230 : vector<1x384xi32>
      %cst_103 = arith.constant 0.000000e+00 : f32
      %232 = vector.broadcast %cst_103 : f32 to vector<1x384xf32>
      %233 = arith.select %231, %85, %232 : vector<1x384xi1>, vector<1x384xf32>
      %234 = vector.shape_cast %233 : vector<1x384xf32> to vector<1x1x384xf32>
      %cst_104 = arith.constant dense<0.000000e+00> : vector<1xf32>
      %235 = vector.multi_reduction <add>, %234, %cst_104 [1, 2] : vector<1x1x384xf32> to vector<1xf32>
      %236 = vector.shape_cast %235 : vector<1xf32> to vector<1x1x1xf32>
      %237 = vector.extract %236[0, 0, 0] : f32 from vector<1x1x1xf32>
      %238 = arith.mulf %229, %237 : f32
      %239 = arith.addf %221, %238 : f32
      %cst_105 = arith.constant 3.81469727E-6 : f32
      %240 = arith.mulf %239, %cst_105 : f32
      %cst_106 = arith.constant 1.000000e+00 : f32
      %241 = arith.subf %cst_106, %240 : f32
      %c0_107 = arith.constant 0 : index
      %242 = memref.load %arg1[%c0_107] : memref<6xf32, #tpu.memory_space<smem>>
      %243 = arith.mulf %97, %242 : f32
      %c1 = arith.constant 1 : index
      %244 = memref.load %arg1[%c1] : memref<6xf32, #tpu.memory_space<smem>>
      %245 = arith.mulf %175, %244 : f32
      %246 = arith.addf %243, %245 : f32
      %c2 = arith.constant 2 : index
      %247 = memref.load %arg1[%c2] : memref<6xf32, #tpu.memory_space<smem>>
      %248 = arith.mulf %163, %247 : f32
      %249 = arith.addf %246, %248 : f32
      %c3 = arith.constant 3 : index
      %250 = memref.load %arg1[%c3] : memref<6xf32, #tpu.memory_space<smem>>
      %251 = arith.mulf %241, %250 : f32
      %252 = arith.addf %249, %251 : f32
      %c4 = arith.constant 4 : index
      %253 = memref.load %arg1[%c4] : memref<6xf32, #tpu.memory_space<smem>>
      %254 = arith.mulf %107, %253 : f32
      %255 = arith.addf %252, %254 : f32
      %c5 = arith.constant 5 : index
      %256 = memref.load %arg1[%c5] : memref<6xf32, #tpu.memory_space<smem>>
      %257 = arith.mulf %185, %256 : f32
      %258 = arith.addf %255, %257 : f32
      %259 = tpu.iota {dimensions = array<i32: 1>} : vector<1x128xi32>
      %c0_i32_108 = arith.constant 0 : i32
      %260 = vector.broadcast %c0_i32_108 : i32 to vector<1x128xi32>
      %261 = arith.cmpi eq, %259, %260 : vector<1x128xi32>
      %cst_109 = arith.constant 0.000000e+00 : f32
      %262 = vector.broadcast %258 : f32 to vector<1x128xf32>
      %263 = vector.broadcast %cst_109 : f32 to vector<1x128xf32>
      %264 = arith.select %261, %262, %263 : vector<1x128xi1>, vector<1x128xf32>
      %c1_i32_110 = arith.constant 1 : i32
      %265 = vector.broadcast %c1_i32_110 : i32 to vector<1x128xi32>
      %266 = arith.cmpi eq, %259, %265 : vector<1x128xi32>
      %cst_111 = arith.constant 0.000000e+00 : f32
      %267 = vector.broadcast %97 : f32 to vector<1x128xf32>
      %268 = vector.broadcast %cst_111 : f32 to vector<1x128xf32>
      %269 = arith.select %266, %267, %268 : vector<1x128xi1>, vector<1x128xf32>
      %270 = arith.addf %264, %269 : vector<1x128xf32>
      %c2_i32_112 = arith.constant 2 : i32
      %271 = vector.broadcast %c2_i32_112 : i32 to vector<1x128xi32>
      %272 = arith.cmpi eq, %259, %271 : vector<1x128xi32>
      %cst_113 = arith.constant 0.000000e+00 : f32
      %273 = vector.broadcast %175 : f32 to vector<1x128xf32>
      %274 = vector.broadcast %cst_113 : f32 to vector<1x128xf32>
      %275 = arith.select %272, %273, %274 : vector<1x128xi1>, vector<1x128xf32>
      %276 = arith.addf %270, %275 : vector<1x128xf32>
      %c3_i32_114 = arith.constant 3 : i32
      %277 = vector.broadcast %c3_i32_114 : i32 to vector<1x128xi32>
      %278 = arith.cmpi eq, %259, %277 : vector<1x128xi32>
      %cst_115 = arith.constant 0.000000e+00 : f32
      %279 = vector.broadcast %163 : f32 to vector<1x128xf32>
      %280 = vector.broadcast %cst_115 : f32 to vector<1x128xf32>
      %281 = arith.select %278, %279, %280 : vector<1x128xi1>, vector<1x128xf32>
      %282 = arith.addf %276, %281 : vector<1x128xf32>
      %c4_i32_116 = arith.constant 4 : i32
      %283 = vector.broadcast %c4_i32_116 : i32 to vector<1x128xi32>
      %284 = arith.cmpi eq, %259, %283 : vector<1x128xi32>
      %cst_117 = arith.constant 0.000000e+00 : f32
      %285 = vector.broadcast %241 : f32 to vector<1x128xf32>
      %286 = vector.broadcast %cst_117 : f32 to vector<1x128xf32>
      %287 = arith.select %284, %285, %286 : vector<1x128xi1>, vector<1x128xf32>
      %288 = arith.addf %282, %287 : vector<1x128xf32>
      %c5_i32_118 = arith.constant 5 : i32
      %289 = vector.broadcast %c5_i32_118 : i32 to vector<1x128xi32>
      %290 = arith.cmpi eq, %259, %289 : vector<1x128xi32>
      %cst_119 = arith.constant 0.000000e+00 : f32
      %291 = vector.broadcast %107 : f32 to vector<1x128xf32>
      %292 = vector.broadcast %cst_119 : f32 to vector<1x128xf32>
      %293 = arith.select %290, %291, %292 : vector<1x128xi1>, vector<1x128xf32>
      %294 = arith.addf %288, %293 : vector<1x128xf32>
      %c6_i32_120 = arith.constant 6 : i32
      %295 = vector.broadcast %c6_i32_120 : i32 to vector<1x128xi32>
      %296 = arith.cmpi eq, %259, %295 : vector<1x128xi32>
      %cst_121 = arith.constant 0.000000e+00 : f32
      %297 = vector.broadcast %185 : f32 to vector<1x128xf32>
      %298 = vector.broadcast %cst_121 : f32 to vector<1x128xf32>
      %299 = arith.select %296, %297, %298 : vector<1x128xi1>, vector<1x128xf32>
      %300 = arith.addf %294, %299 : vector<1x128xf32>
      %c0_122 = arith.constant 0 : index
      %c0_123 = arith.constant 0 : index
      %301 = vector.load %arg5[%c0_122, %c0_123] : memref<1x128xf32, #tpu.memory_space<vmem>>, vector<1x128xf32>
      tpu.vector_store %arg5[%c0_122, %c0_123], %300 {strides = array<i32>} : memref<1x128xf32, #tpu.memory_space<vmem>>, vector<1x128xf32>,
    } else {
    }
    return
  }
  func.func @transform_0(%arg0: i32) -> i32 {
    %c0_i32 = arith.constant 0 : i32
    %c0_i32_0 = arith.constant 0 : i32
    return %c0_i32 : i32
  }
  func.func @transform_1(%arg0: i32) -> (i32, i32) {
    %c0_i32 = arith.constant 0 : i32
    %c0_i32_0 = arith.constant 0 : i32
    %c0_i32_1 = arith.constant 0 : i32
    return %c0_i32, %c0_i32_0 : i32, i32
  }
  func.func @transform_2(%arg0: i32) -> (i32, i32) {
    %c0_i32 = arith.constant 0 : i32
    %c0_i32_0 = arith.constant 0 : i32
    return %arg0, %c0_i32 : i32, i32
  }
  func.func @transform_3(%arg0: i32) -> (i32, i32) {
    %c0_i32 = arith.constant 0 : i32
    %c0_i32_0 = arith.constant 0 : i32
    return %arg0, %c0_i32 : i32, i32
  }
  func.func @transform_4(%arg0: i32) -> (i32, i32) {
    %c0_i32 = arith.constant 0 : i32
    %c0_i32_0 = arith.constant 0 : i32
    %c0_i32_1 = arith.constant 0 : i32
    return %c0_i32, %c0_i32_0 : i32, i32
  }
}

</mosaic_0001>

<llo_original>
// kernel: tpu_custom_call.1
$region0: #{tpu_custom_call.1}
  #allocation0 [shape = 'u32[]', space=smem, size = 0x4, offset = 0x4, fixed_abs, tag = 'smem constant byte address 0x4 - core index']
  #allocation1 [shape = 'u32[144,128]{1,0:T(1,128)}', space=vmem, size = 0x12000, scoped, tag = 'internal scratch']
  #allocation2 [shape = 'f32[8,384]{1,0:T(8,128)}', space=vmem, size = 0x3000, scoped, tag = 'scratch operand']
  #allocation3 [shape = 'f32[8,384]{1,0:T(8,128)}', space=vmem, size = 0x3000, scoped, tag = 'scratch operand']
  #allocation4 [shape = 'f32[8,384]{1,0:T(8,128)}', space=vmem, size = 0x3000, scoped, tag = 'scratch operand']
  #allocation5 [shape = 'f32[8,384]{1,0:T(8,128)}', space=vmem, size = 0x3000, scoped, tag = 'scratch operand']
  %s0 = inlined_call_operand.hbm [shape: f32[6], index: 0, kind: input, shape index: {}]
  %s1 = inlined_call_operand.vmem [shape: s32[1,384], index: 1, kind: input, shape index: {}]
  %s2 = inlined_call_operand.hbm [shape: f32[8,384], index: 2, kind: input, shape index: {}]
  %s3 = inlined_call_operand.hbm [shape: f32[8,384], index: 3, kind: input, shape index: {}]
  %s4 = inlined_call_operand.hbm [shape: f32[1,128], index: 4, kind: output, shape index: {}]
  %s5 = sld [smem:[#allocation0]]
  $region46: #{tpu_custom_call.1} parent=0
    _
  %s7 = ssub.s32 1, %s5
  %s8 = scalar_select 0, %s7, %s5
  $region1: #{tpu_custom_call.1} parent=0
    #allocation6 [shape = 'u8[512]{0}', space=smem, size = 0x200, scoped, tag = 'input window, operand 0, single buffered']
    #allocation7 [shape = 's32[1]{0}', space=sflag, size = 0x4, scoped, tag = 'scoped memory for tpu_custom_call.1']
    #allocation8 [shape = 's32[1]{0}', space=sflag, size = 0x4, scoped, tag = 'scoped memory for tpu_custom_call.1']
    #allocation9 [shape = 's32[1]{0}', space=sflag, size = 0x4, scoped, tag = 'scoped memory for tpu_custom_call.1']
    #allocation10 [shape = 'u8[12288]{0}', space=vmem, size = 0x3000, scoped, tag = 'input window, operand 2, single buffered']
    #allocation11 [shape = 'u8[12288]{0}', space=vmem, size = 0x3000, scoped, tag = 'input window, operand 3, single buffered']
    #allocation12 [shape = 's32[1]{0}', space=sflag, size = 0x4, scoped, tag = 'scoped memory for tpu_custom_call.1']
    #allocation13 [shape = 'u8[512]{0}', space=vmem, size = 0x400, scoped, tag = 'output window, operand 0, single buffered']
    %9 = vsyncpa [#allocation9], 0
    %10 = vsyncpa [#allocation7], 0
    %11 = vsyncpa [#allocation12], 0
    %12 = vsyncpa [#allocation8], 0
    // Predicated region
    $region2: #{tpu_custom_call.1} parent=1 // pred_check
      _
    $region3: #{tpu_custom_call.1} parent=1 // pred_check_branch
      %14 = sbr.rel (0) target = $region5
    $region4: #{tpu_custom_call.1} parent=1 // pred_region
      %s16 = ssub.s32 16, 16
      %17 = vsyncadd [#allocation9], %s16
      %20 = dma.hbm_to_smem %s0, 16, [#allocation6], [#allocation9]
    $region5: #{tpu_custom_call.1} parent=1 // pred_fallthru
      _
    // Predicated region
    $region6: #{tpu_custom_call.1} parent=1 // pred_check
      _
    $region7: #{tpu_custom_call.1} parent=1 // pred_check_branch
      %22 = sbr.rel (0) target = $region9
    $region8: #{tpu_custom_call.1} parent=1 // pred_region
      _
    $region9: #{tpu_custom_call.1} parent=1 // pred_fallthru
      _
    // Predicated region
    $region10: #{tpu_custom_call.1} parent=1 // pred_check
      _
    $region11: #{tpu_custom_call.1} parent=1 // pred_check_branch
      %24 = sbr.rel (0) target = $region13
    $region12: #{tpu_custom_call.1} parent=1 // pred_region
      %s26 = ssub.s32 384, 384
      %27 = vsyncadd [#allocation7], %s26
      %s29 = sshll.u32 [#allocation10], 4
      %s30 = int_to_ptr.vmem [resolvable:$true] %s29
      %32 = dma.hbm_to_vmem [thread:$0]  %s2, 384, %s30, [#allocation7]
    $region13: #{tpu_custom_call.1} parent=1 // pred_fallthru
      _
    // Predicated region
    $region14: #{tpu_custom_call.1} parent=1 // pred_check
      _
    $region15: #{tpu_custom_call.1} parent=1 // pred_check_branch
      %34 = sbr.rel (0) target = $region17
    $region16: #{tpu_custom_call.1} parent=1 // pred_region
      %s36 = ssub.s32 384, 384
      %37 = vsyncadd [#allocation12], %s36
      %s39 = sshll.u32 [#allocation11], 4
      %s40 = int_to_ptr.vmem [resolvable:$true] %s39
      %42 = dma.hbm_to_vmem [thread:$0]  %s3, 384, %s40, [#allocation12]
    $region17: #{tpu_custom_call.1} parent=1 // pred_fallthru
      _
    // Predicated region
    $region18: #{tpu_custom_call.1} parent=1 // pred_check
      _
    $region19: #{tpu_custom_call.1} parent=1 // pred_check_branch
      %44 = sbr.rel (0) target = $region21
    $region20: #{tpu_custom_call.1} parent=1 // pred_region
      %45 = dma.done [#allocation9], 16
    $region21: #{tpu_custom_call.1} parent=1 // pred_fallthru
      _
    // Predicated region
    $region22: #{tpu_custom_call.1} parent=1 // pred_check
      _
    $region23: #{tpu_custom_call.1} parent=1 // pred_check_branch
      %47 = sbr.rel (0) target = $region25
    $region24: #{tpu_custom_call.1} parent=1 // pred_region
      %48 = dma.done [#allocation7], 384
    $region25: #{tpu_custom_call.1} parent=1 // pred_fallthru
      _
    // Predicated region
    $region26: #{tpu_custom_call.1} parent=1 // pred_check
      _
    $region27: #{tpu_custom_call.1} parent=1 // pred_check_branch
      %50 = sbr.rel (0) target = $region29
    $region28: #{tpu_custom_call.1} parent=1 // pred_region
      %51 = dma.done [#allocation12], 384
    $region29: #{tpu_custom_call.1} parent=1 // pred_fallthru
      _
    %52 = sfence
    %p53 = scmp.eq.s32.totalorder 0, 0
    // Predicated region
    $region30: #{tpu_custom_call.1} parent=1 // pred_check
      %p54 = pneg %p53
    $region31: #{tpu_custom_call.1} parent=1 // pred_check_branch
      %56 = sbr.rel (%p54) target = $region33
    $region32: #{tpu_custom_call.1} parent=1 // pred_region
      %57 = vst [vmem:[#allocation2] sm:$0xff] 0.0
      %58 = vst [vmem:[#allocation2 + $0x8] sm:$0xff] 0.0
      %59 = vst [vmem:[#allocation2 + $0x10] sm:$0xff] 0.0
      %60 = vst [vmem:[#allocation3] sm:$0xff] 0.0
      %61 = vst [vmem:[#allocation3 + $0x8] sm:$0xff] 0.0
      %62 = vst [vmem:[#allocation3 + $0x10] sm:$0xff] 0.0
      %63 = vst [vmem:[#allocation4] sm:$0xff] 0.0
      %64 = vst [vmem:[#allocation4 + $0x8] sm:$0xff] 0.0
      %65 = vst [vmem:[#allocation4 + $0x10] sm:$0xff] 0.0
      %66 = vst [vmem:[#allocation5] sm:$0xff] 0.0
      %67 = vst [vmem:[#allocation5 + $0x8] sm:$0xff] 0.0
      %68 = vst [vmem:[#allocation5 + $0x10] sm:$0xff] 0.0
    $region33: #{tpu_custom_call.1} parent=1 // pred_fallthru
      _
    %v69 = vld [vmem:[%s1] sm:$0x7]
    %v70 = vld [vmem:[#allocation10] sm:$0xff]
    %v71 = vld [vmem:[#allocation10 + $0x8] sm:$0xff]
    %v72 = vld [vmem:[#allocation10 + $0x10] sm:$0xff]
    %v73 = vld [vmem:[#allocation11] sm:$0xff]
    %v74 = vld [vmem:[#allocation11 + $0x8] sm:$0xff]
    %v75 = vld [vmem:[#allocation11 + $0x10] sm:$0xff]
    %v76 = vmul.f32 %v70, %v73
    %v77 = vmul.f32 %v71, %v74
    %v78 = vmul.f32 %v72, %v75
    %79 = vrot.lane.b32.xlu0 %v76, 1
    %v80 = vpop.permute.xlu0 %79
    %81 = vrot.lane.b32.xlu0 %v77, 1
    %v82 = vpop.permute.xlu0 %81
    %83 = vrot.lane.b32.xlu0 %v78, 1
    %v84 = vpop.permute.xlu0 %83
    %v85 = vlaneseq
    %v86 = vand.u32 %v85, 127
    %vm87 = vcmp.lt.s32.totalorder %v86, 1
    %v88 = vsel %vm87, %v82, %v84
    %v89 = vsel %vm87, %v80, %v82
    %v90 = vsel %vm87, %v84, %v80
    %v91 = vadd.f32 %v76, %v90
    %v92 = vadd.f32 %v77, %v89
    %v93 = vadd.f32 %v78, %v88
    %94 = vrot.lane.b32.xlu0 %v76, 127
    %v95 = vpop.permute.xlu0 %94
    %96 = vrot.lane.b32.xlu0 %v77, 127
    %v97 = vpop.permute.xlu0 %96
    %98 = vrot.lane.b32.xlu0 %v78, 127
    %v99 = vpop.permute.xlu0 %98
    %vm100 = vcmp.lt.s32.totalorder %v86, 127
    %v101 = vsel %vm100, %v97, %v99
    %v102 = vsel %vm100, %v95, %v97
    %v103 = vsel %vm100, %v99, %v95
    %v104 = vadd.f32 %v91, %v102
    %v105 = vadd.f32 %v92, %v101
    %v106 = vadd.f32 %v93, %v103
    %v107 = vmul.f32 %v70, %v70
    %v108 = vmul.f32 %v71, %v71
    %v109 = vmul.f32 %v72, %v72
    %110 = vrot.lane.b32.xlu0 %v107, 1
    %v111 = vpop.permute.xlu0 %110
    %112 = vrot.lane.b32.xlu0 %v108, 1
    %v113 = vpop.permute.xlu0 %112
    %114 = vrot.lane.b32.xlu0 %v109, 1
    %v115 = vpop.permute.xlu0 %114
    %v116 = vsel %vm87, %v113, %v115
    %v117 = vsel %vm87, %v111, %v113
    %v118 = vsel %vm87, %v115, %v111
    %v119 = vadd.f32 %v107, %v118
    %v120 = vadd.f32 %v108, %v117
    %v121 = vadd.f32 %v109, %v116
    %122 = vrot.lane.b32.xlu0 %v107, 127
    %v123 = vpop.permute.xlu0 %122
    %124 = vrot.lane.b32.xlu0 %v108, 127
    %v125 = vpop.permute.xlu0 %124
    %126 = vrot.lane.b32.xlu0 %v109, 127
    %v127 = vpop.permute.xlu0 %126
    %v128 = vsel %vm100, %v125, %v127
    %v129 = vsel %vm100, %v123, %v125
    %v130 = vsel %vm100, %v127, %v123
    %v131 = vadd.f32 %v119, %v129
    %v132 = vadd.f32 %v120, %v128
    %v133 = vadd.f32 %v121, %v130
    %v134 = vmul.f32 %v73, %v73
    %v135 = vmul.f32 %v74, %v74
    %v136 = vmul.f32 %v75, %v75
    %137 = vrot.lane.b32.xlu0 %v134, 1
    %v138 = vpop.permute.xlu0 %137
    %139 = vrot.lane.b32.xlu0 %v135, 1
    %v140 = vpop.permute.xlu0 %139
    %141 = vrot.lane.b32.xlu0 %v136, 1
    %v142 = vpop.permute.xlu0 %141
    %v143 = vsel %vm87, %v140, %v142
    %v144 = vsel %vm87, %v138, %v140
    %v145 = vsel %vm87, %v142, %v138
    %v146 = vadd.f32 %v134, %v145
    %v147 = vadd.f32 %v135, %v144
    %v148 = vadd.f32 %v136, %v143
    %149 = vrot.lane.b32.xlu0 %v134, 127
    %v150 = vpop.permute.xlu0 %149
    %151 = vrot.lane.b32.xlu0 %v135, 127
    %v152 = vpop.permute.xlu0 %151
    %153 = vrot.lane.b32.xlu0 %v136, 127
    %v154 = vpop.permute.xlu0 %153
    %v155 = vsel %vm100, %v152, %v154
    %v156 = vsel %vm100, %v150, %v152
    %v157 = vsel %vm100, %v154, %v150
    %v158 = vadd.f32 %v146, %v156
    %v159 = vadd.f32 %v147, %v155
    %v160 = vadd.f32 %v148, %v157
    %v161 = vrsqrt.pop %v131
    %v162 = vmul.f32 %v131, %v161
    %vm163 = vcmp.eq.f32.partialorder %v131, inf
    %v164 = vsel %vm163, %v131, %v162
    %vm165 = vcmp.eq.f32.partialorder %v131, 0.0
    %v166 = vand.u32 %v131, 2147483648
    %v167 = vsel %vm165, %v166, %v164
    %v168 = vrsqrt.pop %v132
    %v169 = vmul.f32 %v132, %v168
    %vm170 = vcmp.eq.f32.partialorder %v132, inf
    %v171 = vsel %vm170, %v132, %v169
    %vm172 = vcmp.eq.f32.partialorder %v132, 0.0
    %v173 = vand.u32 %v132, 2147483648
    %v174 = vsel %vm172, %v173, %v171
    %v175 = vrsqrt.pop %v133
    %v176 = vmul.f32 %v133, %v175
    %vm177 = vcmp.eq.f32.partialorder %v133, inf
    %v178 = vsel %vm177, %v133, %v176
    %vm179 = vcmp.eq.f32.partialorder %v133, 0.0
    %v180 = vand.u32 %v133, 2147483648
    %v181 = vsel %vm179, %v180, %v178
    %v182 = vrsqrt.pop %v158
    %v183 = vmul.f32 %v158, %v182
    %vm184 = vcmp.eq.f32.partialorder %v158, inf
    %v185 = vsel %vm184, %v158, %v183
    %vm186 = vcmp.eq.f32.partialorder %v158, 0.0
    %v187 = vand.u32 %v158, 2147483648
    %v188 = vsel %vm186, %v187, %v185
    %v189 = vrsqrt.pop %v159
    %v190 = vmul.f32 %v159, %v189
    %vm191 = vcmp.eq.f32.partialorder %v159, inf
    %v192 = vsel %vm191, %v159, %v190
    %vm193 = vcmp.eq.f32.partialorder %v159, 0.0
    %v194 = vand.u32 %v159, 2147483648
    %v195 = vsel %vm193, %v194, %v192
    %v196 = vrsqrt.pop %v160
    %v197 = vmul.f32 %v160, %v196
    %vm198 = vcmp.eq.f32.partialorder %v160, inf
    %v199 = vsel %vm198, %v160, %v197
    %vm200 = vcmp.eq.f32.partialorder %v160, 0.0
    %v201 = vand.u32 %v160, 2147483648
    %v202 = vsel %vm200, %v201, %v199
    %v203 = vsub.f32 %v70, %v73
    %v204 = vsub.f32 %v71, %v74
    %v205 = vsub.f32 %v72, %v75
    %v206 = vld [vmem:[#allocation2] sm:$0xff]
    %v207 = vld [vmem:[#allocation2 + $0x8] sm:$0xff]
    %v208 = vld [vmem:[#allocation2 + $0x10] sm:$0xff]
    %v209 = vmul.f32 %v203, %v203
    %v210 = vmul.f32 %v204, %v204
    %v211 = vmul.f32 %v205, %v205
    %v212 = vadd.f32 %v206, %v209
    %v213 = vadd.f32 %v207, %v210
    %v214 = vadd.f32 %v208, %v211
    %215 = vst [vmem:[#allocation2] sm:$0xff] %v212
    %216 = vst [vmem:[#allocation2 + $0x8] sm:$0xff] %v213
    %217 = vst [vmem:[#allocation2 + $0x10] sm:$0xff] %v214
    %v218 = vld [vmem:[#allocation3] sm:$0xff]
    %v219 = vld [vmem:[#allocation3 + $0x8] sm:$0xff]
    %v220 = vld [vmem:[#allocation3 + $0x10] sm:$0xff]
    %v221 = vmul.f32 %v188, %v167
    %v222 = vmul.f32 %v195, %v174
    %v223 = vmul.f32 %v202, %v181
    %v224 = vadd.f32 %v221, 1e-06
    %v225 = vadd.f32 %v222, 1e-06
    %v226 = vadd.f32 %v223, 1e-06
    %v227 = vrcp.pop %v224
    %v228 = vrcp.pop %v225
    %v229 = vrcp.pop %v226
    %v230 = vmul.f32 %v104, %v227
    %v231 = vmul.f32 %v105, %v228
    %v232 = vmul.f32 %v106, %v229
    %v233 = vadd.f32 %v218, %v230
    %v234 = vadd.f32 %v219, %v231
    %v235 = vadd.f32 %v220, %v232
    %236 = vst [vmem:[#allocation3] sm:$0xff] %v233
    %237 = vst [vmem:[#allocation3 + $0x8] sm:$0xff] %v234
    %238 = vst [vmem:[#allocation3 + $0x10] sm:$0xff] %v235
    %vm239 = vcmp.eq.s32.totalorder %v69, 1
    %vm240 = vcmp.eq.s32.totalorder %v69, 4
    %vm241 = vmor %vm239, %vm240
    %v242 = vadd.f32 %v167, 1e-06
    %v243 = vadd.f32 %v174, 1e-06
    %v244 = vadd.f32 %v181, 1e-06
    %v245 = vrcp.pop %v242
    %v246 = vrcp.pop %v243
    %v247 = vrcp.pop %v244
    %v248 = vadd.f32 %v188, 1e-06
    %v249 = vadd.f32 %v195, 1e-06
    %v250 = vadd.f32 %v202, 1e-06
    %v251 = vrcp.pop %v248
    %v252 = vrcp.pop %v249
    %v253 = vrcp.pop %v250
    %v254 = vsel %vm241, 1, 0
    %v255 = vlaneseq
    %v256 = vshrl.u32 %v255, 7
    %v257 = vsub.s32 0, %v256
    %v258 = vrot.slane %v254, %v257
    %v259 = vlaneseq
    %v260 = vshrl.u32 %v259, 7
    %v261 = vsub.s32 1, %v260
    %v262 = vrot.slane %v254, %v261
    %v263 = vlaneseq
    %v264 = vshrl.u32 %v263, 7
    %v265 = vsub.s32 2, %v264
    %v266 = vrot.slane %v254, %v265
    %vm267 = vcmp.eq.s32.totalorder %v258, 1
    %vm268 = vcmp.eq.s32.totalorder %v262, 1
    %vm269 = vcmp.eq.s32.totalorder %v266, 1
    %v270 = vsel %vm267, %v245, 0.0
    %v271 = vsel %vm268, %v246, 0.0
    %v272 = vsel %vm269, %v247, 0.0
    %273 = vrot.lane.b32.xlu0 %v270, 1
    %v274 = vpop.permute.xlu0 %273
    %275 = vrot.lane.b32.xlu0 %v271, 1
    %v276 = vpop.permute.xlu0 %275
    %277 = vrot.lane.b32.xlu0 %v272, 1
    %v278 = vpop.permute.xlu0 %277
    %v279 = vsel %vm87, %v276, %v278
    %v280 = vsel %vm87, %v274, %v276
    %v281 = vsel %vm87, %v278, %v274
    %v282 = vadd.f32 %v270, %v281
    %v283 = vadd.f32 %v271, %v280
    %v284 = vadd.f32 %v272, %v279
    %285 = vrot.lane.b32.xlu0 %v270, 127
    %v286 = vpop.permute.xlu0 %285
    %287 = vrot.lane.b32.xlu0 %v271, 127
    %v288 = vpop.permute.xlu0 %287
    %289 = vrot.lane.b32.xlu0 %v272, 127
    %v290 = vpop.permute.xlu0 %289
    %v291 = vsel %vm100, %v288, %v290
    %v292 = vsel %vm100, %v286, %v288
    %v293 = vsel %vm100, %v290, %v286
    %v294 = vadd.f32 %v282, %v292
    %v295 = vadd.f32 %v283, %v291
    %v296 = vadd.f32 %v284, %v293
    %v297 = vsel %vm267, %v251, 0.0
    %v298 = vsel %vm268, %v252, 0.0
    %v299 = vsel %vm269, %v253, 0.0
    %300 = vrot.lane.b32.xlu0 %v297, 1
    %v301 = vpop.permute.xlu0 %300
    %302 = vrot.lane.b32.xlu0 %v298, 1
    %v303 = vpop.permute.xlu0 %302
    %304 = vrot.lane.b32.xlu0 %v299, 1
    %v305 = vpop.permute.xlu0 %304
    %v306 = vsel %vm87, %v303, %v305
    %v307 = vsel %vm87, %v301, %v303
    %v308 = vsel %vm87, %v305, %v301
    %v309 = vadd.f32 %v297, %v308
    %v310 = vadd.f32 %v298, %v307
    %v311 = vadd.f32 %v299, %v306
    %312 = vrot.lane.b32.xlu0 %v297, 127
    %v313 = vpop.permute.xlu0 %312
    %314 = vrot.lane.b32.xlu0 %v298, 127
    %v315 = vpop.permute.xlu0 %314
    %316 = vrot.lane.b32.xlu0 %v299, 127
    %v317 = vpop.permute.xlu0 %316
    %v318 = vsel %vm100, %v315, %v317
    %v319 = vsel %vm100, %v313, %v315
    %v320 = vsel %vm100, %v317, %v313
    %v321 = vadd.f32 %v309, %v319
    %v322 = vadd.f32 %v310, %v318
    %v323 = vadd.f32 %v311, %v320
    %v324 = vld [vmem:[#allocation4] sm:$0xff]
    %v325 = vld [vmem:[#allocation4 + $0x8] sm:$0xff]
    %v326 = vld [vmem:[#allocation4 + $0x10] sm:$0xff]
    %v327 = vmul.f32 %v70, %v294
    %v328 = vmul.f32 %v71, %v295
    %v329 = vmul.f32 %v72, %v296
    %v330 = vadd.f32 %v324, %v327
    %v331 = vadd.f32 %v325, %v328
    %v332 = vadd.f32 %v326, %v329
    %333 = vst [vmem:[#allocation4] sm:$0xff] %v330
    %334 = vst [vmem:[#allocation4 + $0x8] sm:$0xff] %v331
    %335 = vst [vmem:[#allocation4 + $0x10] sm:$0xff] %v332
    %v336 = vld [vmem:[#allocation5] sm:$0xff]
    %v337 = vld [vmem:[#allocation5 + $0x8] sm:$0xff]
    %v338 = vld [vmem:[#allocation5 + $0x10] sm:$0xff]
    %v339 = vmul.f32 %v73, %v321
    %v340 = vmul.f32 %v74, %v322
    %v341 = vmul.f32 %v75, %v323
    %v342 = vadd.f32 %v336, %v339
    %v343 = vadd.f32 %v337, %v340
    %v344 = vadd.f32 %v338, %v341
    %345 = vst [vmem:[#allocation5] sm:$0xff] %v342
    %346 = vst [vmem:[#allocation5 + $0x8] sm:$0xff] %v343
    %347 = vst [vmem:[#allocation5 + $0x10] sm:$0xff] %v344
    // Predicated region
    $region34: #{tpu_custom_call.1} parent=1 // pred_check
      %p348 = pneg %p53
    $region35: #{tpu_custom_call.1} parent=1 // pred_check_branch
      %350 = sbr.rel (%p348) target = $region37
    $region36: #{tpu_custom_call.1} parent=1 // pred_region
      %v351 = vld [vmem:[#allocation2] sm:$0xff]
      %v352 = vld [vmem:[#allocation2 + $0x8] sm:$0xff]
      %v353 = vld [vmem:[#allocation2 + $0x10] sm:$0xff]
      %v354 = vrot.slane %v351, 4
      %v355 = vadd.f32 %v351, %v354
      %v356 = vrot.slane %v355, 2
      %v357 = vadd.f32 %v355, %v356
      %v358 = vrot.slane %v357, 1
      %v359 = vadd.f32 %v357, %v358
      %v360 = vrot.slane %v352, 4
      %v361 = vadd.f32 %v352, %v360
      %v362 = vrot.slane %v361, 2
      %v363 = vadd.f32 %v361, %v362
      %v364 = vrot.slane %v363, 1
      %v365 = vadd.f32 %v363, %v364
      %v366 = vrot.slane %v353, 4
      %v367 = vadd.f32 %v353, %v366
      %v368 = vrot.slane %v367, 2
      %v369 = vadd.f32 %v367, %v368
      %v370 = vrot.slane %v369, 1
      %v371 = vadd.f32 %v369, %v370
      %v372 = vld [vmem:[#allocation3] sm:$0xff]
      %v373 = vld [vmem:[#allocation3 + $0x8] sm:$0xff]
      %v374 = vld [vmem:[#allocation3 + $0x10] sm:$0xff]
      %v375 = vrot.slane %v372, 4
      %v376 = vadd.f32 %v372, %v375
      %v377 = vrot.slane %v376, 2
      %v378 = vadd.f32 %v376, %v377
      %v379 = vrot.slane %v378, 1
      %v380 = vadd.f32 %v378, %v379
      %v381 = vrot.slane %v373, 4
      %v382 = vadd.f32 %v373, %v381
      %v383 = vrot.slane %v382, 2
      %v384 = vadd.f32 %v382, %v383
      %v385 = vrot.slane %v384, 1
      %v386 = vadd.f32 %v384, %v385
      %v387 = vrot.slane %v374, 4
      %v388 = vadd.f32 %v374, %v387
      %v389 = vrot.slane %v388, 2
      %v390 = vadd.f32 %v388, %v389
      %v391 = vrot.slane %v390, 1
      %v392 = vadd.f32 %v390, %v391
      %v393 = vld [vmem:[#allocation4] sm:$0xff]
      %v394 = vld [vmem:[#allocation4 + $0x8] sm:$0xff]
      %v395 = vld [vmem:[#allocation4 + $0x10] sm:$0xff]
      %v396 = vrot.slane %v393, 4
      %v397 = vadd.f32 %v393, %v396
      %v398 = vrot.slane %v397, 2
      %v399 = vadd.f32 %v397, %v398
      %v400 = vrot.slane %v399, 1
      %v401 = vadd.f32 %v399, %v400
      %v402 = vrot.slane %v394, 4
      %v403 = vadd.f32 %v394, %v402
      %v404 = vrot.slane %v403, 2
      %v405 = vadd.f32 %v403, %v404
      %v406 = vrot.slane %v405, 1
      %v407 = vadd.f32 %v405, %v406
      %v408 = vrot.slane %v395, 4
      %v409 = vadd.f32 %v395, %v408
      %v410 = vrot.slane %v409, 2
      %v411 = vadd.f32 %v409, %v410
      %v412 = vrot.slane %v411, 1
      %v413 = vadd.f32 %v411, %v412
      %v414 = vld [vmem:[#allocation5] sm:$0xff]
      %v415 = vld [vmem:[#allocation5 + $0x8] sm:$0xff]
      %v416 = vld [vmem:[#allocation5 + $0x10] sm:$0xff]
      %v417 = vrot.slane %v414, 4
      %v418 = vadd.f32 %v414, %v417
      %v419 = vrot.slane %v418, 2
      %v420 = vadd.f32 %v418, %v419
      %v421 = vrot.slane %v420, 1
      %v422 = vadd.f32 %v420, %v421
      %v423 = vrot.slane %v415, 4
      %v424 = vadd.f32 %v415, %v423
      %v425 = vrot.slane %v424, 2
      %v426 = vadd.f32 %v424, %v425
      %v427 = vrot.slane %v426, 1
      %v428 = vadd.f32 %v426, %v427
      %v429 = vrot.slane %v416, 4
      %v430 = vadd.f32 %v416, %v429
      %v431 = vrot.slane %v430, 2
      %v432 = vadd.f32 %v430, %v431
      %v433 = vrot.slane %v432, 1
      %v434 = vadd.f32 %v432, %v433
      %vm435 = vcmp.ge.s32.totalorder %v69, 0
      %vm436 = vcmp.lt.s32.totalorder %v69, 3
      %vm437 = vmand %vm435, %vm436
      %v441 = vcombine.low %v359, %v365
      %v443 = vunpack.c.l.s4 1966171168
      %v444 = vunpack.c.0.s8 %v443
      %v445 = vlaneseq
      %v446 = vshrl.u32 %v445, 7
      %v447 = vsub.s32 %v444, %v446
      %v448 = vrot.slane %v441, %v447
      %v450 = vunpack.c.l.s4 1966171168
      %v451 = vunpack.c.0.s8 %v450
      %v452 = vlaneseq
      %v453 = vshrl.u32 %v452, 7
      %v454 = vsub.s32 %v451, %v453
      %v455 = vrot.slane %v371, %v454
      %v456 = vcombine.low %v448, %v455
      %v458 = vunpack.c.l.s4 1966171168
      %v459 = vunpack.c.0.s8 %v458
      %v460 = vlaneseq
      %v461 = vshrl.u32 %v460, 7
      %v462 = vsub.s32 %v459, %v461
      %v463 = vrot.slane %v456, %v462
      %v465 = vsel %vm437, %v463, 0.0
      %v467 = vlaneseq
      %v468 = vshrl.u32 %v467, 7
      %v469 = vsub.s32 0, %v468
      %v470 = vrot.slane %v465, %v469
      %v471 = vlaneseq
      %v472 = vshrl.u32 %v471, 7
      %v473 = vsub.s32 1, %v472
      %v474 = vrot.slane %v465, %v473
      %v475 = vlaneseq
      %v476 = vshrl.u32 %v475, 7
      %v477 = vsub.s32 2, %v476
      %v478 = vrot.slane %v465, %v477
      %vm482 = vcmask 1040384
      %v483 = vsel %vm482, %v470, 0.0
      %v484 = vsel %vm482, %v474, 0.0
      %v485 = vadd.f32 %v483, %v484
      %v486 = vsel %vm482, %v478, 0.0
      %v487 = vadd.f32 %v485, %v486
      %488 = vadd.xlane.f32.xlu0 %v487
      %v489 = vpop.xlane.xlu0 %488
      %v490 = vrot.slane %v489, 4
      %v491 = vadd.f32 %v489, %v490
      %v492 = vrot.slane %v491, 2
      %v493 = vadd.f32 %v491, %v492
      %v494 = vrot.slane %v493, 1
      %v495 = vadd.f32 %v493, %v494
      %s496 = vtos %v495
      %s497 = smul.f32 %s496, 0.0006510417
      %v501 = vcombine.low %v380, %v386
      %v503 = vunpack.c.l.s4 1966171168
      %v504 = vunpack.c.0.s8 %v503
      %v505 = vlaneseq
      %v506 = vshrl.u32 %v505, 7
      %v507 = vsub.s32 %v504, %v506
      %v508 = vrot.slane %v501, %v507
      %v510 = vunpack.c.l.s4 1966171168
      %v511 = vunpack.c.0.s8 %v510
      %v512 = vlaneseq
      %v513 = vshrl.u32 %v512, 7
      %v514 = vsub.s32 %v511, %v513
      %v515 = vrot.slane %v392, %v514
      %v516 = vcombine.low %v508, %v515
      %v518 = vunpack.c.l.s4 1966171168
      %v519 = vunpack.c.0.s8 %v518
      %v520 = vlaneseq
      %v521 = vshrl.u32 %v520, 7
      %v522 = vsub.s32 %v519, %v521
      %v523 = vrot.slane %v516, %v522
      %v525 = vsel %vm239, %v523, 0.0
      %v527 = vlaneseq
      %v528 = vshrl.u32 %v527, 7
      %v529 = vsub.s32 0, %v528
      %v530 = vrot.slane %v525, %v529
      %v531 = vlaneseq
      %v532 = vshrl.u32 %v531, 7
      %v533 = vsub.s32 1, %v532
      %v534 = vrot.slane %v525, %v533
      %v535 = vlaneseq
      %v536 = vshrl.u32 %v535, 7
      %v537 = vsub.s32 2, %v536
      %v538 = vrot.slane %v525, %v537
      %v542 = vsel %vm482, %v530, 0.0
      %v543 = vsel %vm482, %v534, 0.0
      %v544 = vadd.f32 %v542, %v543
      %v545 = vsel %vm482, %v538, 0.0
      %v546 = vadd.f32 %v544, %v545
      %547 = vadd.xlane.f32.xlu0 %v546
      %v548 = vpop.xlane.xlu0 %547
      %v549 = vrot.slane %v548, 4
      %v550 = vadd.f32 %v548, %v549
      %v551 = vrot.slane %v550, 2
      %v552 = vadd.f32 %v550, %v551
      %v553 = vrot.slane %v552, 1
      %v554 = vadd.f32 %v552, %v553
      %s555 = vtos %v554
      %s556 = smul.f32 %s555, 0.001953125
      %s557 = ssub.f32 1.0, %s556
      %vm558 = vcmp.eq.s32.totalorder %v69, 0
      %v562 = vcombine.low %v401, %v407
      %v564 = vunpack.c.l.s4 1966171168
      %v565 = vunpack.c.0.s8 %v564
      %v566 = vlaneseq
      %v567 = vshrl.u32 %v566, 7
      %v568 = vsub.s32 %v565, %v567
      %v569 = vrot.slane %v562, %v568
      %v571 = vunpack.c.l.s4 1966171168
      %v572 = vunpack.c.0.s8 %v571
      %v573 = vlaneseq
      %v574 = vshrl.u32 %v573, 7
      %v575 = vsub.s32 %v572, %v574
      %v576 = vrot.slane %v413, %v575
      %v577 = vcombine.low %v569, %v576
      %v579 = vunpack.c.l.s4 1966171168
      %v580 = vunpack.c.0.s8 %v579
      %v581 = vlaneseq
      %v582 = vshrl.u32 %v581, 7
      %v583 = vsub.s32 %v580, %v582
      %v584 = vrot.slane %v577, %v583
      %v586 = vsel %vm558, %v584, 0.0
      %v588 = vlaneseq
      %v589 = vshrl.u32 %v588, 7
      %v590 = vsub.s32 0, %v589
      %v591 = vrot.slane %v586, %v590
      %v592 = vlaneseq
      %v593 = vshrl.u32 %v592, 7
      %v594 = vsub.s32 1, %v593
      %v595 = vrot.slane %v586, %v594
      %v596 = vlaneseq
      %v597 = vshrl.u32 %v596, 7
      %v598 = vsub.s32 2, %v597
      %v599 = vrot.slane %v586, %v598
      %v603 = vsel %vm482, %v591, 0.0
      %v604 = vsel %vm482, %v595, 0.0
      %v605 = vadd.f32 %v603, %v604
      %v606 = vsel %vm482, %v599, 0.0
      %v607 = vadd.f32 %v605, %v606
      %608 = vadd.xlane.f32.xlu0 %v607
      %v609 = vpop.xlane.xlu0 %608
      %v610 = vrot.slane %v609, 4
      %v611 = vadd.f32 %v609, %v610
      %v612 = vrot.slane %v611, 2
      %v613 = vadd.f32 %v611, %v612
      %v614 = vrot.slane %v613, 1
      %v615 = vadd.f32 %v613, %v614
      %s616 = vtos %v615
      %v620 = vcombine.low %v422, %v428
      %v622 = vunpack.c.l.s4 1966171168
      %v623 = vunpack.c.0.s8 %v622
      %v624 = vlaneseq
      %v625 = vshrl.u32 %v624, 7
      %v626 = vsub.s32 %v623, %v625
      %v627 = vrot.slane %v620, %v626
      %v629 = vunpack.c.l.s4 1966171168
      %v630 = vunpack.c.0.s8 %v629
      %v631 = vlaneseq
      %v632 = vshrl.u32 %v631, 7
      %v633 = vsub.s32 %v630, %v632
      %v634 = vrot.slane %v434, %v633
      %v635 = vcombine.low %v627, %v634
      %v637 = vunpack.c.l.s4 1966171168
      %v638 = vunpack.c.0.s8 %v637
      %v639 = vlaneseq
      %v640 = vshrl.u32 %v639, 7
      %v641 = vsub.s32 %v638, %v640
      %v642 = vrot.slane %v635, %v641
      %v644 = vsel %vm558, %v642, 0.0
      %v646 = vlaneseq
      %v647 = vshrl.u32 %v646, 7
      %v648 = vsub.s32 0, %v647
      %v649 = vrot.slane %v644, %v648
      %v650 = vlaneseq
      %v651 = vshrl.u32 %v650, 7
      %v652 = vsub.s32 1, %v651
      %v653 = vrot.slane %v644, %v652
      %v654 = vlaneseq
      %v655 = vshrl.u32 %v654, 7
      %v656 = vsub.s32 2, %v655
      %v657 = vrot.slane %v644, %v656
      %v661 = vsel %vm482, %v649, 0.0
      %v662 = vsel %vm482, %v653, 0.0
      %v663 = vadd.f32 %v661, %v662
      %v664 = vsel %vm482, %v657, 0.0
      %v665 = vadd.f32 %v663, %v664
      %666 = vadd.xlane.f32.xlu0 %v665
      %v667 = vpop.xlane.xlu0 %666
      %v668 = vrot.slane %v667, 4
      %v669 = vadd.f32 %v667, %v668
      %v670 = vrot.slane %v669, 2
      %v671 = vadd.f32 %v669, %v670
      %v672 = vrot.slane %v671, 1
      %v673 = vadd.f32 %v671, %v672
      %s674 = vtos %v673
      %s675 = smul.f32 %s616, %s674
      %s676 = sadd.f32 %s675, 0.0
      %v677 = vsel %vm239, %v584, 0.0
      %v679 = vlaneseq
      %v680 = vshrl.u32 %v679, 7
      %v681 = vsub.s32 0, %v680
      %v682 = vrot.slane %v677, %v681
      %v683 = vlaneseq
      %v684 = vshrl.u32 %v683, 7
      %v685 = vsub.s32 1, %v684
      %v686 = vrot.slane %v677, %v685
      %v687 = vlaneseq
      %v688 = vshrl.u32 %v687, 7
      %v689 = vsub.s32 2, %v688
      %v690 = vrot.slane %v677, %v689
      %v694 = vsel %vm482, %v682, 0.0
      %v695 = vsel %vm482, %v686, 0.0
      %v696 = vadd.f32 %v694, %v695
      %v697 = vsel %vm482, %v690, 0.0
      %v698 = vadd.f32 %v696, %v697
      %699 = vadd.xlane.f32.xlu0 %v698
      %v700 = vpop.xlane.xlu0 %699
      %v701 = vrot.slane %v700, 4
      %v702 = vadd.f32 %v700, %v701
      %v703 = vrot.slane %v702, 2
      %v704 = vadd.f32 %v702, %v703
      %v705 = vrot.slane %v704, 1
      %v706 = vadd.f32 %v704, %v705
      %s707 = vtos %v706
      %v708 = vsel %vm239, %v642, 0.0
      %v710 = vlaneseq
      %v711 = vshrl.u32 %v710, 7
      %v712 = vsub.s32 0, %v711
      %v713 = vrot.slane %v708, %v712
      %v714 = vlaneseq
      %v715 = vshrl.u32 %v714, 7
      %v716 = vsub.s32 1, %v715
      %v717 = vrot.slane %v708, %v716
      %v718 = vlaneseq
      %v719 = vshrl.u32 %v718, 7
      %v720 = vsub.s32 2, %v719
      %v721 = vrot.slane %v708, %v720
      %v725 = vsel %vm482, %v713, 0.0
      %v726 = vsel %vm482, %v717, 0.0
      %v727 = vadd.f32 %v725, %v726
      %v728 = vsel %vm482, %v721, 0.0
      %v729 = vadd.f32 %v727, %v728
      %730 = vadd.xlane.f32.xlu0 %v729
      %v731 = vpop.xlane.xlu0 %730
      %v732 = vrot.slane %v731, 4
      %v733 = vadd.f32 %v731, %v732
      %v734 = vrot.slane %v733, 2
      %v735 = vadd.f32 %v733, %v734
      %v736 = vrot.slane %v735, 1
      %v737 = vadd.f32 %v735, %v736
      %s738 = vtos %v737
      %s739 = smul.f32 %s707, %s738
      %s740 = sadd.f32 %s676, %s739
      %vm741 = vcmp.eq.s32.totalorder %v69, 2
      %v742 = vsel %vm741, %v584, 0.0
      %v744 = vlaneseq
      %v745 = vshrl.u32 %v744, 7
      %v746 = vsub.s32 0, %v745
      %v747 = vrot.slane %v742, %v746
      %v748 = vlaneseq
      %v749 = vshrl.u32 %v748, 7
      %v750 = vsub.s32 1, %v749
      %v751 = vrot.slane %v742, %v750
      %v752 = vlaneseq
      %v753 = vshrl.u32 %v752, 7
      %v754 = vsub.s32 2, %v753
      %v755 = vrot.slane %v742, %v754
      %v759 = vsel %vm482, %v747, 0.0
      %v760 = vsel %vm482, %v751, 0.0
      %v761 = vadd.f32 %v759, %v760
      %v762 = vsel %vm482, %v755, 0.0
      %v763 = vadd.f32 %v761, %v762
      %764 = vadd.xlane.f32.xlu0 %v763
      %v765 = vpop.xlane.xlu0 %764
      %v766 = vrot.slane %v765, 4
      %v767 = vadd.f32 %v765, %v766
      %v768 = vrot.slane %v767, 2
      %v769 = vadd.f32 %v767, %v768
      %v770 = vrot.slane %v769, 1
      %v771 = vadd.f32 %v769, %v770
      %s772 = vtos %v771
      %v773 = vsel %vm741, %v642, 0.0
      %v775 = vlaneseq
      %v776 = vshrl.u32 %v775, 7
      %v777 = vsub.s32 0, %v776
      %v778 = vrot.slane %v773, %v777
      %v779 = vlaneseq
      %v780 = vshrl.u32 %v779, 7
      %v781 = vsub.s32 1, %v780
      %v782 = vrot.slane %v773, %v781
      %v783 = vlaneseq
      %v784 = vshrl.u32 %v783, 7
      %v785 = vsub.s32 2, %v784
      %v786 = vrot.slane %v773, %v785
      %v790 = vsel %vm482, %v778, 0.0
      %v791 = vsel %vm482, %v782, 0.0
      %v792 = vadd.f32 %v790, %v791
      %v793 = vsel %vm482, %v786, 0.0
      %v794 = vadd.f32 %v792, %v793
      %795 = vadd.xlane.f32.xlu0 %v794
      %v796 = vpop.xlane.xlu0 %795
      %v797 = vrot.slane %v796, 4
      %v798 = vadd.f32 %v796, %v797
      %v799 = vrot.slane %v798, 2
      %v800 = vadd.f32 %v798, %v799
      %v801 = vrot.slane %v800, 1
      %v802 = vadd.f32 %v800, %v801
      %s803 = vtos %v802
      %s804 = smul.f32 %s772, %s803
      %s805 = sadd.f32 %s740, %s804
      %s806 = smul.f32 %s805, 3.8146973e-06
      %s807 = ssub.f32 1.0, %s806
      %vm808 = vcmp.ge.s32.totalorder %v69, 3
      %vm809 = vcmp.lt.s32.totalorder %v69, 6
      %vm810 = vmand %vm808, %vm809
      %v811 = vsel %vm810, %v463, 0.0
      %v813 = vlaneseq
      %v814 = vshrl.u32 %v813, 7
      %v815 = vsub.s32 0, %v814
      %v816 = vrot.slane %v811, %v815
      %v817 = vlaneseq
      %v818 = vshrl.u32 %v817, 7
      %v819 = vsub.s32 1, %v818
      %v820 = vrot.slane %v811, %v819
      %v821 = vlaneseq
      %v822 = vshrl.u32 %v821, 7
      %v823 = vsub.s32 2, %v822
      %v824 = vrot.slane %v811, %v823
      %v828 = vsel %vm482, %v816, 0.0
      %v829 = vsel %vm482, %v820, 0.0
      %v830 = vadd.f32 %v828, %v829
      %v831 = vsel %vm482, %v824, 0.0
      %v832 = vadd.f32 %v830, %v831
      %833 = vadd.xlane.f32.xlu0 %v832
      %v834 = vpop.xlane.xlu0 %833
      %v835 = vrot.slane %v834, 4
      %v836 = vadd.f32 %v834, %v835
      %v837 = vrot.slane %v836, 2
      %v838 = vadd.f32 %v836, %v837
      %v839 = vrot.slane %v838, 1
      %v840 = vadd.f32 %v838, %v839
      %s841 = vtos %v840
      %s842 = smul.f32 %s841, 0.0006510417
      %v843 = vsel %vm240, %v523, 0.0
      %v845 = vlaneseq
      %v846 = vshrl.u32 %v845, 7
      %v847 = vsub.s32 0, %v846
      %v848 = vrot.slane %v843, %v847
      %v849 = vlaneseq
      %v850 = vshrl.u32 %v849, 7
      %v851 = vsub.s32 1, %v850
      %v852 = vrot.slane %v843, %v851
      %v853 = vlaneseq
      %v854 = vshrl.u32 %v853, 7
      %v855 = vsub.s32 2, %v854
      %v856 = vrot.slane %v843, %v855
      %v860 = vsel %vm482, %v848, 0.0
      %v861 = vsel %vm482, %v852, 0.0
      %v862 = vadd.f32 %v860, %v861
      %v863 = vsel %vm482, %v856, 0.0
      %v864 = vadd.f32 %v862, %v863
      %865 = vadd.xlane.f32.xlu0 %v864
      %v866 = vpop.xlane.xlu0 %865
      %v867 = vrot.slane %v866, 4
      %v868 = vadd.f32 %v866, %v867
      %v869 = vrot.slane %v868, 2
      %v870 = vadd.f32 %v868, %v869
      %v871 = vrot.slane %v870, 1
      %v872 = vadd.f32 %v870, %v871
      %s873 = vtos %v872
      %s874 = smul.f32 %s873, 0.001953125
      %s875 = ssub.f32 1.0, %s874
      %vm876 = vcmp.eq.s32.totalorder %v69, 3
      %v877 = vsel %vm876, %v584, 0.0
      %v879 = vlaneseq
      %v880 = vshrl.u32 %v879, 7
      %v881 = vsub.s32 0, %v880
      %v882 = vrot.slane %v877, %v881
      %v883 = vlaneseq
      %v884 = vshrl.u32 %v883, 7
      %v885 = vsub.s32 1, %v884
      %v886 = vrot.slane %v877, %v885
      %v887 = vlaneseq
      %v888 = vshrl.u32 %v887, 7
      %v889 = vsub.s32 2, %v888
      %v890 = vrot.slane %v877, %v889
      %v894 = vsel %vm482, %v882, 0.0
      %v895 = vsel %vm482, %v886, 0.0
      %v896 = vadd.f32 %v894, %v895
      %v897 = vsel %vm482, %v890, 0.0
      %v898 = vadd.f32 %v896, %v897
      %899 = vadd.xlane.f32.xlu0 %v898
      %v900 = vpop.xlane.xlu0 %899
      %v901 = vrot.slane %v900, 4
      %v902 = vadd.f32 %v900, %v901
      %v903 = vrot.slane %v902, 2
      %v904 = vadd.f32 %v902, %v903
      %v905 = vrot.slane %v904, 1
      %v906 = vadd.f32 %v904, %v905
      %s907 = vtos %v906
      %v908 = vsel %vm876, %v642, 0.0
      %v910 = vlaneseq
      %v911 = vshrl.u32 %v910, 7
      %v912 = vsub.s32 0, %v911
      %v913 = vrot.slane %v908, %v912
      %v914 = vlaneseq
      %v915 = vshrl.u32 %v914, 7
      %v916 = vsub.s32 1, %v915
      %v917 = vrot.slane %v908, %v916
      %v918 = vlaneseq
      %v919 = vshrl.u32 %v918, 7
      %v920 = vsub.s32 2, %v919
      %v921 = vrot.slane %v908, %v920
      %v925 = vsel %vm482, %v913, 0.0
      %v926 = vsel %vm482, %v917, 0.0
      %v927 = vadd.f32 %v925, %v926
      %v928 = vsel %vm482, %v921, 0.0
      %v929 = vadd.f32 %v927, %v928
      %930 = vadd.xlane.f32.xlu0 %v929
      %v931 = vpop.xlane.xlu0 %930
      %v932 = vrot.slane %v931, 4
      %v933 = vadd.f32 %v931, %v932
      %v934 = vrot.slane %v933, 2
      %v935 = vadd.f32 %v933, %v934
      %v936 = vrot.slane %v935, 1
      %v937 = vadd.f32 %v935, %v936
      %s938 = vtos %v937
      %s939 = smul.f32 %s907, %s938
      %s940 = sadd.f32 %s939, 0.0
      %v941 = vsel %vm240, %v584, 0.0
      %v943 = vlaneseq
      %v944 = vshrl.u32 %v943, 7
      %v945 = vsub.s32 0, %v944
      %v946 = vrot.slane %v941, %v945
      %v947 = vlaneseq
      %v948 = vshrl.u32 %v947, 7
      %v949 = vsub.s32 1, %v948
      %v950 = vrot.slane %v941, %v949
      %v951 = vlaneseq
      %v952 = vshrl.u32 %v951, 7
      %v953 = vsub.s32 2, %v952
      %v954 = vrot.slane %v941, %v953
      %v958 = vsel %vm482, %v946, 0.0
      %v959 = vsel %vm482, %v950, 0.0
      %v960 = vadd.f32 %v958, %v959
      %v961 = vsel %vm482, %v954, 0.0
      %v962 = vadd.f32 %v960, %v961
      %963 = vadd.xlane.f32.xlu0 %v962
      %v964 = vpop.xlane.xlu0 %963
      %v965 = vrot.slane %v964, 4
      %v966 = vadd.f32 %v964, %v965
      %v967 = vrot.slane %v966, 2
      %v968 = vadd.f32 %v966, %v967
      %v969 = vrot.slane %v968, 1
      %v970 = vadd.f32 %v968, %v969
      %s971 = vtos %v970
      %v972 = vsel %vm240, %v642, 0.0
      %v974 = vlaneseq
      %v975 = vshrl.u32 %v974, 7
      %v976 = vsub.s32 0, %v975
      %v977 = vrot.slane %v972, %v976
      %v978 = vlaneseq
      %v979 = vshrl.u32 %v978, 7
      %v980 = vsub.s32 1, %v979
      %v981 = vrot.slane %v972, %v980
      %v982 = vlaneseq
      %v983 = vshrl.u32 %v982, 7
      %v984 = vsub.s32 2, %v983
      %v985 = vrot.slane %v972, %v984
      %v989 = vsel %vm482, %v977, 0.0
      %v990 = vsel %vm482, %v981, 0.0
      %v991 = vadd.f32 %v989, %v990
      %v992 = vsel %vm482, %v985, 0.0
      %v993 = vadd.f32 %v991, %v992
      %994 = vadd.xlane.f32.xlu0 %v993
      %v995 = vpop.xlane.xlu0 %994
      %v996 = vrot.slane %v995, 4
      %v997 = vadd.f32 %v995, %v996
      %v998 = vrot.slane %v997, 2
      %v999 = vadd.f32 %v997, %v998
      %v1000 = vrot.slane %v999, 1
      %v1001 = vadd.f32 %v999, %v1000
      %s1002 = vtos %v1001
      %s1003 = smul.f32 %s971, %s1002
      %s1004 = sadd.f32 %s940, %s1003
      %vm1005 = vcmp.eq.s32.totalorder %v69, 5
      %v1006 = vsel %vm1005, %v584, 0.0
      %v1008 = vlaneseq
      %v1009 = vshrl.u32 %v1008, 7
      %v1010 = vsub.s32 0, %v1009
      %v1011 = vrot.slane %v1006, %v1010
      %v1012 = vlaneseq
      %v1013 = vshrl.u32 %v1012, 7
      %v1014 = vsub.s32 1, %v1013
      %v1015 = vrot.slane %v1006, %v1014
      %v1016 = vlaneseq
      %v1017 = vshrl.u32 %v1016, 7
      %v1018 = vsub.s32 2, %v1017
      %v1019 = vrot.slane %v1006, %v1018
      %v1023 = vsel %vm482, %v1011, 0.0
      %v1024 = vsel %vm482, %v1015, 0.0
      %v1025 = vadd.f32 %v1023, %v1024
      %v1026 = vsel %vm482, %v1019, 0.0
      %v1027 = vadd.f32 %v1025, %v1026
      %1028 = vadd.xlane.f32.xlu0 %v1027
      %v1029 = vpop.xlane.xlu0 %1028
      %v1030 = vrot.slane %v1029, 4
      %v1031 = vadd.f32 %v1029, %v1030
      %v1032 = vrot.slane %v1031, 2
      %v1033 = vadd.f32 %v1031, %v1032
      %v1034 = vrot.slane %v1033, 1
      %v1035 = vadd.f32 %v1033, %v1034
      %s1036 = vtos %v1035
      %v1037 = vsel %vm1005, %v642, 0.0
      %v1039 = vlaneseq
      %v1040 = vshrl.u32 %v1039, 7
      %v1041 = vsub.s32 0, %v1040
      %v1042 = vrot.slane %v1037, %v1041
      %v1043 = vlaneseq
      %v1044 = vshrl.u32 %v1043, 7
      %v1045 = vsub.s32 1, %v1044
      %v1046 = vrot.slane %v1037, %v1045
      %v1047 = vlaneseq
      %v1048 = vshrl.u32 %v1047, 7
      %v1049 = vsub.s32 2, %v1048
      %v1050 = vrot.slane %v1037, %v1049
      %v1054 = vsel %vm482, %v1042, 0.0
      %v1055 = vsel %vm482, %v1046, 0.0
      %v1056 = vadd.f32 %v1054, %v1055
      %v1057 = vsel %vm482, %v1050, 0.0
      %v1058 = vadd.f32 %v1056, %v1057
      %1059 = vadd.xlane.f32.xlu0 %v1058
      %v1060 = vpop.xlane.xlu0 %1059
      %v1061 = vrot.slane %v1060, 4
      %v1062 = vadd.f32 %v1060, %v1061
      %v1063 = vrot.slane %v1062, 2
      %v1064 = vadd.f32 %v1062, %v1063
      %v1065 = vrot.slane %v1064, 1
      %v1066 = vadd.f32 %v1064, %v1065
      %s1067 = vtos %v1066
      %s1068 = smul.f32 %s1036, %s1067
      %s1069 = sadd.f32 %s1004, %s1068
      %s1070 = smul.f32 %s1069, 3.8146973e-06
      %s1071 = ssub.f32 1.0, %s1070
      %s1072 = sld [smem:[#allocation6]]
      %s1073 = smul.f32 %s497, %s1072
      %s1074 = sld [smem:[#allocation6 + $0x1]]
      %s1075 = smul.f32 %s842, %s1074
      %s1076 = sadd.f32 %s1073, %s1075
      %s1077 = sld [smem:[#allocation6 + $0x2]]
      %s1078 = smul.f32 %s807, %s1077
      %s1079 = sadd.f32 %s1076, %s1078
      %s1080 = sld [smem:[#allocation6 + $0x3]]
      %s1081 = smul.f32 %s1071, %s1080
      %s1082 = sadd.f32 %s1079, %s1081
      %s1083 = sld [smem:[#allocation6 + $0x4]]
      %s1084 = smul.f32 %s557, %s1083
      %s1085 = sadd.f32 %s1082, %s1084
      %s1086 = sld [smem:[#allocation6 + $0x5]]
      %s1087 = smul.f32 %s875, %s1086
      %s1088 = sadd.f32 %s1085, %s1087
      %vm1089 = vcmp.eq.s32.totalorder %v86, 0
      %v1090 = vstv %s1088
      %v1091 = vsel %vm1089, %v1090, 0.0
      %vm1092 = vcmp.eq.s32.totalorder %v86, 1
      %v1093 = vstv %s497
      %v1094 = vsel %vm1092, %v1093, 0.0
      %v1095 = vadd.f32 %v1091, %v1094
      %vm1096 = vcmp.eq.s32.totalorder %v86, 2
      %v1097 = vstv %s842
      %v1098 = vsel %vm1096, %v1097, 0.0
      %v1099 = vadd.f32 %v1095, %v1098
      %vm1100 = vcmp.eq.s32.totalorder %v86, 3
      %v1101 = vstv %s807
      %v1102 = vsel %vm1100, %v1101, 0.0
      %v1103 = vadd.f32 %v1099, %v1102
      %vm1104 = vcmp.eq.s32.totalorder %v86, 4
      %v1105 = vstv %s1071
      %v1106 = vsel %vm1104, %v1105, 0.0
      %v1107 = vadd.f32 %v1103, %v1106
      %vm1108 = vcmp.eq.s32.totalorder %v86, 5
      %v1109 = vstv %s557
      %v1110 = vsel %vm1108, %v1109, 0.0
      %v1111 = vadd.f32 %v1107, %v1110
      %vm1112 = vcmp.eq.s32.totalorder %v86, 6
      %v1113 = vstv %s875
      %v1114 = vsel %vm1112, %v1113, 0.0
      %v1115 = vadd.f32 %v1111, %v1114
      %1116 = vst [vmem:[#allocation13] sm:$0x1] %v1115
    $region37: #{tpu_custom_call.1} parent=1 // pred_fallthru
      _
    // Predicated region
    $region38: #{tpu_custom_call.1} parent=1 // pred_check
      _
    $region39: #{tpu_custom_call.1} parent=1 // pred_check_branch
      %1118 = sbr.rel (0) target = $region41
    $region40: #{tpu_custom_call.1} parent=1 // pred_region
      %s1120 = ssub.s32 16, 16
      %1121 = vsyncadd [#allocation8], %s1120
      %s1123 = sshll.u32 [#allocation13], 4
      %s1124 = int_to_ptr.vmem [resolvable:$true] %s1123
      %1126 = dma.vmem_to_hbm [thread:$0]  %s1124, 16, %s4, [#allocation8]
    $region41: #{tpu_custom_call.1} parent=1 // pred_fallthru
      _
    // Predicated region
    $region42: #{tpu_custom_call.1} parent=1 // pred_check
      _
    $region43: #{tpu_custom_call.1} parent=1 // pred_check_branch
      %1128 = sbr.rel (0) target = $region45
    $region44: #{tpu_custom_call.1} parent=1 // pred_region
      %1129 = dma.done [#allocation8], 16
    $region45: #{tpu_custom_call.1} parent=1 // pred_fallthru
      _
    %1130 = vsyncpa [#allocation7], 1
    %1131 = vsyncpa [#allocation12], 1
    %1132 = vsyncpa [#allocation8], 1
    %1133 = vsyncpa [#allocation9], 1

</llo_original>
